<compile_context>
chip_gen: v5e
topology: v5e:2x2
jax: 0.10.0
libtpu: 0.0.40
codegen_flags: <defaults>
</compile_context>

<pallas_src>
import functools

import jax
import jax.numpy as jnp
import numpy as np
from jax.experimental import pallas as pl
from jax.experimental.pallas import tpu as pltpu

# ---- model hyper-parameters implied by the module --------------------------
VOCAB_SIZE = 50            # synthetic vocab
OUTPUT_SIZE = 4
EMB = 128
C1, C2 = 64, 32
K = 3
SEQ_LEN = 20               # 20 -> conv1 -> 18 -> conv2 -> 16 ; 32*16 = 512
L1_LEN = SEQ_LEN - (K - 1)          # 18
L2_LEN = L1_LEN - (K - 1)           # 16
LINEAR_SIZE = C2 * L2_LEN           # 512
HIDDEN = 64

# Lane-padded sizes used inside the kernel.
VP = 128                   # padded vocab (one-hot width), VOCAB_SIZE <= 128
C1P = 128                  # conv1 out channels padded 64  -> 128
C2P = 128                  # conv2 out channels padded 32  -> 128
OUT_PAD = 128              # logits padded 4 -> 128 (lane-dense store)


def _round_up(x, m):
    return (x + m - 1) // m * m


# ---------------------------------------------------------------------------
# Kernel: one batch tile per grid step, time-major activations.
#   tok_ref : (20, TB, 1)    int32 tokens (trailing unit lane dim)
#   emb_ref : (128, 128)     bf16 embedding table (vocab padded, row 1 = 0)
#   w1_ref  : (384, 128)     bf16 conv1 im2col weight (cout padded)
#   w2_ref  : (384, 128)     bf16 conv2 im2col weight (cin/cout padded)
#   w3_ref  : (2048, 64)     bf16 linear1 weight, torch flatten pre-permuted
#   w4_ref  : (64, 128)      bf16 linear2 weight (out padded)
#   b*_ref  : (1, n)         f32 biases (padded with zeros)
#   o_ref   : (TB, 128)      f32 output tile (cols >= OUTPUT_SIZE unused)
# ---------------------------------------------------------------------------
def convnet_kernel(tok_ref, emb_ref, w1_ref, b1_ref, w2_ref, b2_ref,
                   w3_ref, b3_ref, w4_ref, b4_ref, o_ref):
    TB = tok_ref.shape[1]

    # ---- fused embedding: one-hot(tokens) @ emb_table (padding_idx row = 0) -
    tok = tok_ref[...]                                          # (20, TB, 1)
    iota_v = jax.lax.broadcasted_iota(jnp.int32, (SEQ_LEN, TB, VP), 2)
    onehot = (tok == iota_v).astype(jnp.bfloat16)               # (20, TB, 128)
    x = jnp.dot(onehot.reshape(SEQ_LEN * TB, VP), emb_ref[...],
                preferred_element_type=jnp.float32)
    x = x.astype(jnp.bfloat16).reshape(SEQ_LEN, TB, EMB)        # (20, TB, 128)

    # ---- conv1 + ReLU as ONE im2col matmul: (18*TB, 384) @ (384, 128) ------
    slab1 = jnp.concatenate([x[k:k + L1_LEN] for k in range(K)], axis=-1)
    y1 = jnp.dot(slab1.reshape(L1_LEN * TB, K * EMB), w1_ref[...],
                 preferred_element_type=jnp.float32)
    y1 = jnp.maximum(y1 + b1_ref[...], 0.0).astype(jnp.bfloat16)
    y1 = y1.reshape(L1_LEN, TB, C1P)                            # chans >=64 are 0

    # ---- conv2 + ReLU: (16*TB, 384) @ (384, 128) ---------------------------
    slab2 = jnp.concatenate([y1[k:k + L2_LEN] for k in range(K)], axis=-1)
    y2 = jnp.dot(slab2.reshape(L2_LEN * TB, K * C1P), w2_ref[...],
                 preferred_element_type=jnp.float32)
    y2 = jnp.maximum(y2 + b2_ref[...], 0.0).astype(jnp.bfloat16)
    y2 = y2.reshape(L2_LEN, TB, C2P)                            # chans >=32 are 0

    # dropout1 / dropout2: identity at inference time.

    # ---- linear1 + ReLU: torch's channel-major .view(-1, 512) is absorbed
    # into the pre-permuted (2048, 64) weight; the flatten is a free,
    # 128-lane-aligned concat of the 16 time slices (leading-dim indexing).
    flat = jnp.concatenate([y2[t] for t in range(L2_LEN)], axis=-1)  # (TB, 2048)
    h = jnp.dot(flat, w3_ref[...], preferred_element_type=jnp.float32)
    h = jnp.maximum(h + b3_ref[...], 0.0).astype(jnp.bfloat16)       # (TB, 64)

    # ---- linear2: lane-dense (TB, 128) store -------------------------------
    out = jnp.dot(h, w4_ref[...], preferred_element_type=jnp.float32)
    o_ref[...] = out + b4_ref[...]


@functools.partial(jax.jit, static_argnames=("batch_tile",))
def convolutional_model_forward(tokens, params, *, batch_tile=128):
    """tokens: (B, SEQ_LEN) integer array.  Returns (B, OUTPUT_SIZE) float32."""
    emb_table, W1, bb1, W2, bb2, W3, bb3, W4, bb4 = params
    B = tokens.shape[0]

    TB = min(batch_tile, _round_up(B, 16))        # multiple of 16 (bf16 sublanes)
    B_pad = _round_up(B, TB)
    grid = (B_pad // TB,)

    # ---- glue: pad / permute parameters into kernel-friendly layouts -------
    emb_p = jnp.zeros((VP, EMB), jnp.float32).at[:VOCAB_SIZE].set(emb_table)
    emb_p = emb_p.astype(jnp.bfloat16)            # row 1 (padding_idx) is zero

    # conv1: (Cout, Cin, K) -> im2col (K*Cin, C1P), cout zero-padded to 128.
    w1 = jnp.transpose(W1, (2, 1, 0)).reshape(K * EMB, C1)
    w1p = jnp.zeros((K * EMB, C1P), jnp.float32).at[:, :C1].set(w1)
    w1p = w1p.astype(jnp.bfloat16)
    b1p = jnp.zeros((1, C1P), jnp.float32).at[:, :C1].set(bb1)

    # conv2: cin 64->128 and cout 32->128 zero-padded.
    w2 = jnp.transpose(W2, (2, 1, 0))                            # (K, C1, C2)
    w2p = jnp.zeros((K, C1P, C2P), jnp.float32).at[:, :C1, :C2].set(w2)
    w2p = w2p.reshape(K * C1P, C2P).astype(jnp.bfloat16)
    b2p = jnp.zeros((1, C2P), jnp.float32).at[:, :C2].set(bb2)

    # linear1: torch flat index is c*16 + t; kernel flat index is t*128 + c.
    w3t = jnp.transpose(W3.reshape(HIDDEN, C2, L2_LEN), (2, 1, 0))   # (16,32,64)
    w3p = jnp.zeros((L2_LEN, C2P, HIDDEN), jnp.float32).at[:, :C2, :].set(w3t)
    w3p = w3p.reshape(L2_LEN * C2P, HIDDEN).astype(jnp.bfloat16)     # (2048, 64)
    b3p = bb3.reshape(1, HIDDEN).astype(jnp.float32)

    # linear2: (out, hidden) -> (hidden, OUT_PAD) with zero-padded columns.
    w4p = jnp.zeros((HIDDEN, OUT_PAD), jnp.float32).at[:, :OUTPUT_SIZE].set(W4.T)
    w4p = w4p.astype(jnp.bfloat16)
    b4p = jnp.zeros((1, OUT_PAD), jnp.float32).at[:, :OUTPUT_SIZE].set(bb4)

    # Tokens: pad batch to B_pad with padding_idx=1, transpose to time-major
    # and add a trailing unit (lane) dim so the in-kernel one-hot compare is a
    # natively supported lane-broadcast (no in-kernel relayout).
    tok = jnp.full((B_pad, SEQ_LEN), 1, jnp.int32)
    tok = tok.at[:B].set(tokens.astype(jnp.int32))
    tok = jnp.transpose(tok, (1, 0))[:, :, None]                 # (20, B_pad, 1)

    out = pl.pallas_call(
        convnet_kernel,
        out_shape=jax.ShapeDtypeStruct((B_pad, OUT_PAD), jnp.float32),
        grid=grid,
        in_specs=[
            pl.BlockSpec((SEQ_LEN, TB, 1), lambda i: (0, i, 0)),       # tokens
            pl.BlockSpec((VP, EMB), lambda i: (0, 0)),                 # emb
            pl.BlockSpec((K * EMB, C1P), lambda i: (0, 0)),            # w1
            pl.BlockSpec((1, C1P), lambda i: (0, 0)),                  # b1
            pl.BlockSpec((K * C1P, C2P), lambda i: (0, 0)),            # w2
            pl.BlockSpec((1, C2P), lambda i: (0, 0)),                  # b2
            pl.BlockSpec((L2_LEN * C2P, HIDDEN), lambda i: (0, 0)),    # w3
            pl.BlockSpec((1, HIDDEN), lambda i: (0, 0)),               # b3
            pl.BlockSpec((HIDDEN, OUT_PAD), lambda i: (0, 0)),         # w4
            pl.BlockSpec((1, OUT_PAD), lambda i: (0, 0)),              # b4
        ],
        out_specs=pl.BlockSpec((TB, OUT_PAD), lambda i: (i, 0)),
        compiler_params=pltpu.CompilerParams(
            dimension_semantics=("parallel",),
            vmem_limit_bytes=32 * 1024 * 1024,   # safe on v5e/v6e/v7x
        ),
    )(tok, emb_p, w1p, b1p, w2p, b2p, w3p, b3p, w4p, b4p)

    return out[:B, :OUTPUT_SIZE]


# ---------------------------------------------------------------------------
# Pure-JAX f32 reference mirroring the PyTorch NCW convention (verification).
# ---------------------------------------------------------------------------
def reference_forward(tokens, params):
    emb_table, W1, bb1, W2, bb2, W3, bb3, W4, bb4 = params
    B = tokens.shape[0]
    x = emb_table[tokens].astype(jnp.float32)        # (B, L, 128)
    x = jnp.transpose(x, (0, 2, 1))                  # (B, 128, L)  NCW

    def conv1d(x, W, b):                             # W: (Cout, Cin, K)
        Cout, Cin, Kk = W.shape
        Lout = x.shape[-1] - Kk + 1
        out = sum(jnp.einsum('bcl,oc->bol', x[:, :, k:k + Lout], W[:, :, k])
                  for k in range(Kk))
        return out + b[None, :, None]

    h = jax.nn.relu(conv1d(x, W1, bb1))              # (B, 64, 18)
    h = jax.nn.relu(conv1d(h, W2, bb2))              # (B, 32, 16)
    flat = h.reshape(B, -1)                          # torch .view(-1, 512)
    h = jax.nn.relu(flat @ W3.T + bb3)
    return h @ W4.T + bb4


def init_params(key):
    ks = jax.random.split(key, 9)
    emb_table = 0.1 * jax.random.normal(ks[0], (VOCAB_SIZE, EMB), jnp.float32)
    emb_table = emb_table.at[1].set(0.0)             # padding_idx = 1
    W1 = 0.1 * jax.random.normal(ks[1], (C1, EMB, K), jnp.float32)
    bb1 = 0.1 * jax.random.normal(ks[2], (C1,), jnp.float32)
    W2 = 0.1 * jax.random.normal(ks[3], (C2, C1, K), jnp.float32)
    bb2 = 0.1 * jax.random.normal(ks[4], (C2,), jnp.float32)
    W3 = 0.1 * jax.random.normal(ks[5], (HIDDEN, LINEAR_SIZE), jnp.float32)
    bb3 = 0.1 * jax.random.normal(ks[6], (HIDDEN,), jnp.float32)
    W4 = 0.1 * jax.random.normal(ks[7], (OUTPUT_SIZE, HIDDEN), jnp.float32)
    bb4 = 0.1 * jax.random.normal(ks[8], (OUTPUT_SIZE,), jnp.float32)
    return (emb_table, W1, bb1, W2, bb2, W3, bb3, W4, bb4)


if __name__ == "__main__":
    key = jax.random.PRNGKey(0)
    pkey, tkey = jax.random.split(key)
    params = init_params(pkey)

    B = 16
    tokens = jax.random.randint(tkey, (B, SEQ_LEN), 0, VOCAB_SIZE, dtype=jnp.int32)
    tokens = tokens.at[0, -5:].set(1)                # exercise padding_idx rows
    tokens = tokens.at[3, :4].set(1)

    out = jax.block_until_ready(convolutional_model_forward(tokens, params))
    ref = jax.block_until_ready(reference_forward(tokens, params))

    # bf16 MXU operands with f32 accumulation -> loose tolerance vs f32 ref.
    np.testing.assert_allclose(np.asarray(out), np.asarray(ref),
                               rtol=5e-2, atol=5e-2)
    assert out.shape == (B, OUTPUT_SIZE)
    print("KERNEL_OK")
</pallas_src>

<mosaic_0001>
module attributes {stable_mosaic.version = 11 : i64} {
  func.func @convnet_kernel(%arg0: i32, %arg1: memref<20x16x1xi32, #tpu.memory_space<vmem>>, %arg2: memref<128x128xbf16, #tpu.memory_space<vmem>>, %arg3: memref<384x128xbf16, #tpu.memory_space<vmem>>, %arg4: memref<1x128xf32, #tpu.memory_space<vmem>>, %arg5: memref<384x128xbf16, #tpu.memory_space<vmem>>, %arg6: memref<1x128xf32, #tpu.memory_space<vmem>>, %arg7: memref<2048x64xbf16, #tpu.memory_space<vmem>>, %arg8: memref<1x64xf32, #tpu.memory_space<vmem>>, %arg9: memref<64x128xbf16, #tpu.memory_space<vmem>>, %arg10: memref<1x128xf32, #tpu.memory_space<vmem>>, %arg11: memref<16x128xf32, #tpu.memory_space<vmem>>) attributes {dimension_semantics = [#tpu.dimension_semantics<parallel>], iteration_bounds = array<i64: 1>, scalar_prefetch = 0 : i64, scratch_operands = 0 : i64, tpu.core_type = #tpu.core_type<tc>, window_params = [{transform_indices = @transform_0, window_bounds = array<i64: 20, 16, 1>}, {pipeline_mode = #tpu.pipeline_mode<synchronous>, transform_indices = @transform_1, window_bounds = array<i64: 128, 128>}, {pipeline_mode = #tpu.pipeline_mode<synchronous>, transform_indices = @transform_2, window_bounds = array<i64: 384, 128>}, {pipeline_mode = #tpu.pipeline_mode<synchronous>, transform_indices = @transform_3, window_bounds = array<i64: 1, 128>}, {pipeline_mode = #tpu.pipeline_mode<synchronous>, transform_indices = @transform_4, window_bounds = array<i64: 384, 128>}, {pipeline_mode = #tpu.pipeline_mode<synchronous>, transform_indices = @transform_5, window_bounds = array<i64: 1, 128>}, {pipeline_mode = #tpu.pipeline_mode<synchronous>, transform_indices = @transform_6, window_bounds = array<i64: 2048, 64>}, {pipeline_mode = #tpu.pipeline_mode<synchronous>, transform_indices = @transform_7, window_bounds = array<i64: 1, 64>}, {pipeline_mode = #tpu.pipeline_mode<synchronous>, transform_indices = @transform_8, window_bounds = array<i64: 64, 128>}, {pipeline_mode = #tpu.pipeline_mode<synchronous>, transform_indices = @transform_9, window_bounds = array<i64: 1, 128>}, {transform_indices = @transform_10, window_bounds = array<i64: 16, 128>}]} {
    %c0 = arith.constant 0 : index
    %c0_0 = arith.constant 0 : index
    %c0_1 = arith.constant 0 : index
    %0 = vector.load %arg1[%c0, %c0_0, %c0_1] : memref<20x16x1xi32, #tpu.memory_space<vmem>>, vector<20x16x1xi32>
    %1 = tpu.iota {dimensions = array<i32: 2>} : vector<20x16x128xi32>
    %2 = vector.broadcast %0 : vector<20x16x1xi32> to vector<20x16x128xi32>
    %3 = arith.cmpi eq, %2, %1 : vector<20x16x128xi32>
    %4 = arith.extui %3 : vector<20x16x128xi1> to vector<20x16x128xi32>
    %5 = arith.sitofp %4 : vector<20x16x128xi32> to vector<20x16x128xf32>
    %6 = arith.truncf %5 : vector<20x16x128xf32> to vector<20x16x128xbf16>
    %7 = vector.shape_cast %6 : vector<20x16x128xbf16> to vector<320x128xbf16>
    %c0_2 = arith.constant 0 : index
    %c0_3 = arith.constant 0 : index
    %8 = vector.load %arg2[%c0_2, %c0_3] : memref<128x128xbf16, #tpu.memory_space<vmem>>, vector<128x128xbf16>
    %cst = arith.constant dense<0.000000e+00> : vector<320x128xf32>
    %9 = tpu.matmul %7, %8, %cst {dimension_numbers = #tpu.dot_dimension_numbers<[1], [0], [0], [1], [0, 0, 1, 1], [], []>} : vector<320x128xbf16>, vector<128x128xbf16>, vector<320x128xf32> -> vector<320x128xf32>
    %10 = arith.truncf %9 : vector<320x128xf32> to vector<320x128xbf16>
    %11 = vector.shape_cast %10 : vector<320x128xbf16> to vector<20x16x128xbf16>
    %12 = vector.extract_strided_slice %11 {offsets = [0, 0, 0], sizes = [18, 16, 128], strides = [1, 1, 1]} : vector<20x16x128xbf16> to vector<18x16x128xbf16>
    %13 = vector.extract_strided_slice %11 {offsets = [1, 0, 0], sizes = [18, 16, 128], strides = [1, 1, 1]} : vector<20x16x128xbf16> to vector<18x16x128xbf16>
    %14 = vector.extract_strided_slice %11 {offsets = [2, 0, 0], sizes = [18, 16, 128], strides = [1, 1, 1]} : vector<20x16x128xbf16> to vector<18x16x128xbf16>
    %15 = tpu.concatenate %12, %13, %14 in 2 : vector<18x16x128xbf16>, vector<18x16x128xbf16>, vector<18x16x128xbf16> -> vector<18x16x384xbf16>
    %16 = vector.shape_cast %15 : vector<18x16x384xbf16> to vector<288x384xbf16>
    %c0_4 = arith.constant 0 : index
    %c0_5 = arith.constant 0 : index
    %17 = vector.load %arg3[%c0_4, %c0_5] : memref<384x128xbf16, #tpu.memory_space<vmem>>, vector<384x128xbf16>
    %cst_6 = arith.constant dense<0.000000e+00> : vector<288x128xf32>
    %18 = tpu.matmul %16, %17, %cst_6 {dimension_numbers = #tpu.dot_dimension_numbers<[1], [0], [0], [1], [0, 0, 1, 1], [], []>} : vector<288x384xbf16>, vector<384x128xbf16>, vector<288x128xf32> -> vector<288x128xf32>
    %c0_7 = arith.constant 0 : index
    %c0_8 = arith.constant 0 : index
    %19 = vector.load %arg4[%c0_7, %c0_8] : memref<1x128xf32, #tpu.memory_space<vmem>>, vector<1x128xf32>
    %20 = vector.broadcast %19 : vector<1x128xf32> to vector<288x128xf32>
    %21 = arith.addf %18, %20 : vector<288x128xf32>
    %cst_9 = arith.constant 0.000000e+00 : f32
    %22 = vector.broadcast %cst_9 : f32 to vector<288x128xf32>
    %23 = arith.maximumf %21, %22 : vector<288x128xf32>
    %24 = arith.truncf %23 : vector<288x128xf32> to vector<288x128xbf16>
    %25 = vector.shape_cast %24 : vector<288x128xbf16> to vector<18x16x128xbf16>
    %26 = vector.extract_strided_slice %25 {offsets = [0, 0, 0], sizes = [16, 16, 128], strides = [1, 1, 1]} : vector<18x16x128xbf16> to vector<16x16x128xbf16>
    %27 = vector.extract_strided_slice %25 {offsets = [1, 0, 0], sizes = [16, 16, 128], strides = [1, 1, 1]} : vector<18x16x128xbf16> to vector<16x16x128xbf16>
    %28 = vector.extract_strided_slice %25 {offsets = [2, 0, 0], sizes = [16, 16, 128], strides = [1, 1, 1]} : vector<18x16x128xbf16> to vector<16x16x128xbf16>
    %29 = tpu.concatenate %26, %27, %28 in 2 : vector<16x16x128xbf16>, vector<16x16x128xbf16>, vector<16x16x128xbf16> -> vector<16x16x384xbf16>
    %30 = vector.shape_cast %29 : vector<16x16x384xbf16> to vector<256x384xbf16>
    %c0_10 = arith.constant 0 : index
    %c0_11 = arith.constant 0 : index
    %31 = vector.load %arg5[%c0_10, %c0_11] : memref<384x128xbf16, #tpu.memory_space<vmem>>, vector<384x128xbf16>
    %cst_12 = arith.constant dense<0.000000e+00> : vector<256x128xf32>
    %32 = tpu.matmul %30, %31, %cst_12 {dimension_numbers = #tpu.dot_dimension_numbers<[1], [0], [0], [1], [0, 0, 1, 1], [], []>} : vector<256x384xbf16>, vector<384x128xbf16>, vector<256x128xf32> -> vector<256x128xf32>
    %c0_13 = arith.constant 0 : index
    %c0_14 = arith.constant 0 : index
    %33 = vector.load %arg6[%c0_13, %c0_14] : memref<1x128xf32, #tpu.memory_space<vmem>>, vector<1x128xf32>
    %34 = vector.broadcast %33 : vector<1x128xf32> to vector<256x128xf32>
    %35 = arith.addf %32, %34 : vector<256x128xf32>
    %cst_15 = arith.constant 0.000000e+00 : f32
    %36 = vector.broadcast %cst_15 : f32 to vector<256x128xf32>
    %37 = arith.maximumf %35, %36 : vector<256x128xf32>
    %38 = arith.truncf %37 : vector<256x128xf32> to vector<256x128xbf16>
    %39 = vector.shape_cast %38 : vector<256x128xbf16> to vector<16x16x128xbf16>
    %40 = vector.extract_strided_slice %39 {offsets = [0, 0, 0], sizes = [1, 16, 128], strides = [1, 1, 1]} : vector<16x16x128xbf16> to vector<1x16x128xbf16>
    %41 = vector.shape_cast %40 : vector<1x16x128xbf16> to vector<16x128xbf16>
    %42 = vector.extract_strided_slice %39 {offsets = [1, 0, 0], sizes = [1, 16, 128], strides = [1, 1, 1]} : vector<16x16x128xbf16> to vector<1x16x128xbf16>
    %43 = vector.shape_cast %42 : vector<1x16x128xbf16> to vector<16x128xbf16>
    %44 = vector.extract_strided_slice %39 {offsets = [2, 0, 0], sizes = [1, 16, 128], strides = [1, 1, 1]} : vector<16x16x128xbf16> to vector<1x16x128xbf16>
    %45 = vector.shape_cast %44 : vector<1x16x128xbf16> to vector<16x128xbf16>
    %46 = vector.extract_strided_slice %39 {offsets = [3, 0, 0], sizes = [1, 16, 128], strides = [1, 1, 1]} : vector<16x16x128xbf16> to vector<1x16x128xbf16>
    %47 = vector.shape_cast %46 : vector<1x16x128xbf16> to vector<16x128xbf16>
    %48 = vector.extract_strided_slice %39 {offsets = [4, 0, 0], sizes = [1, 16, 128], strides = [1, 1, 1]} : vector<16x16x128xbf16> to vector<1x16x128xbf16>
    %49 = vector.shape_cast %48 : vector<1x16x128xbf16> to vector<16x128xbf16>
    %50 = vector.extract_strided_slice %39 {offsets = [5, 0, 0], sizes = [1, 16, 128], strides = [1, 1, 1]} : vector<16x16x128xbf16> to vector<1x16x128xbf16>
    %51 = vector.shape_cast %50 : vector<1x16x128xbf16> to vector<16x128xbf16>
    %52 = vector.extract_strided_slice %39 {offsets = [6, 0, 0], sizes = [1, 16, 128], strides = [1, 1, 1]} : vector<16x16x128xbf16> to vector<1x16x128xbf16>
    %53 = vector.shape_cast %52 : vector<1x16x128xbf16> to vector<16x128xbf16>
    %54 = vector.extract_strided_slice %39 {offsets = [7, 0, 0], sizes = [1, 16, 128], strides = [1, 1, 1]} : vector<16x16x128xbf16> to vector<1x16x128xbf16>
    %55 = vector.shape_cast %54 : vector<1x16x128xbf16> to vector<16x128xbf16>
    %56 = vector.extract_strided_slice %39 {offsets = [8, 0, 0], sizes = [1, 16, 128], strides = [1, 1, 1]} : vector<16x16x128xbf16> to vector<1x16x128xbf16>
    %57 = vector.shape_cast %56 : vector<1x16x128xbf16> to vector<16x128xbf16>
    %58 = vector.extract_strided_slice %39 {offsets = [9, 0, 0], sizes = [1, 16, 128], strides = [1, 1, 1]} : vector<16x16x128xbf16> to vector<1x16x128xbf16>
    %59 = vector.shape_cast %58 : vector<1x16x128xbf16> to vector<16x128xbf16>
    %60 = vector.extract_strided_slice %39 {offsets = [10, 0, 0], sizes = [1, 16, 128], strides = [1, 1, 1]} : vector<16x16x128xbf16> to vector<1x16x128xbf16>
    %61 = vector.shape_cast %60 : vector<1x16x128xbf16> to vector<16x128xbf16>
    %62 = vector.extract_strided_slice %39 {offsets = [11, 0, 0], sizes = [1, 16, 128], strides = [1, 1, 1]} : vector<16x16x128xbf16> to vector<1x16x128xbf16>
    %63 = vector.shape_cast %62 : vector<1x16x128xbf16> to vector<16x128xbf16>
    %64 = vector.extract_strided_slice %39 {offsets = [12, 0, 0], sizes = [1, 16, 128], strides = [1, 1, 1]} : vector<16x16x128xbf16> to vector<1x16x128xbf16>
    %65 = vector.shape_cast %64 : vector<1x16x128xbf16> to vector<16x128xbf16>
    %66 = vector.extract_strided_slice %39 {offsets = [13, 0, 0], sizes = [1, 16, 128], strides = [1, 1, 1]} : vector<16x16x128xbf16> to vector<1x16x128xbf16>
    %67 = vector.shape_cast %66 : vector<1x16x128xbf16> to vector<16x128xbf16>
    %68 = vector.extract_strided_slice %39 {offsets = [14, 0, 0], sizes = [1, 16, 128], strides = [1, 1, 1]} : vector<16x16x128xbf16> to vector<1x16x128xbf16>
    %69 = vector.shape_cast %68 : vector<1x16x128xbf16> to vector<16x128xbf16>
    %70 = vector.extract_strided_slice %39 {offsets = [15, 0, 0], sizes = [1, 16, 128], strides = [1, 1, 1]} : vector<16x16x128xbf16> to vector<1x16x128xbf16>
    %71 = vector.shape_cast %70 : vector<1x16x128xbf16> to vector<16x128xbf16>
    %72 = tpu.concatenate %41, %43, %45, %47, %49, %51, %53, %55, %57, %59, %61, %63, %65, %67, %69, %71 in 1 : vector<16x128xbf16>, vector<16x128xbf16>, vector<16x128xbf16>, vector<16x128xbf16>, vector<16x128xbf16>, vector<16x128xbf16>, vector<16x128xbf16>, vector<16x128xbf16>, vector<16x128xbf16>, vector<16x128xbf16>, vector<16x128xbf16>, vector<16x128xbf16>, vector<16x128xbf16>, vector<16x128xbf16>, vector<16x128xbf16>, vector<16x128xbf16> -> vector<16x2048xbf16>
    %c0_16 = arith.constant 0 : index
    %c0_17 = arith.constant 0 : index
    %73 = vector.load %arg7[%c0_16, %c0_17] : memref<2048x64xbf16, #tpu.memory_space<vmem>>, vector<2048x64xbf16>
    %cst_18 = arith.constant dense<0.000000e+00> : vector<16x64xf32>
    %74 = tpu.matmul %72, %73, %cst_18 {dimension_numbers = #tpu.dot_dimension_numbers<[1], [0], [0], [1], [0, 0, 1, 1], [], []>} : vector<16x2048xbf16>, vector<2048x64xbf16>, vector<16x64xf32> -> vector<16x64xf32>
    %c0_19 = arith.constant 0 : index
    %c0_20 = arith.constant 0 : index
    %75 = vector.load %arg8[%c0_19, %c0_20] : memref<1x64xf32, #tpu.memory_space<vmem>>, vector<1x64xf32>
    %76 = vector.broadcast %75 : vector<1x64xf32> to vector<16x64xf32>
    %77 = arith.addf %74, %76 : vector<16x64xf32>
    %cst_21 = arith.constant 0.000000e+00 : f32
    %78 = vector.broadcast %cst_21 : f32 to vector<16x64xf32>
    %79 = arith.maximumf %77, %78 : vector<16x64xf32>
    %80 = arith.truncf %79 : vector<16x64xf32> to vector<16x64xbf16>
    %c0_22 = arith.constant 0 : index
    %c0_23 = arith.constant 0 : index
    %81 = vector.load %arg9[%c0_22, %c0_23] : memref<64x128xbf16, #tpu.memory_space<vmem>>, vector<64x128xbf16>
    %cst_24 = arith.constant dense<0.000000e+00> : vector<16x128xf32>
    %82 = tpu.matmul %80, %81, %cst_24 {dimension_numbers = #tpu.dot_dimension_numbers<[1], [0], [0], [1], [0, 0, 1, 1], [], []>} : vector<16x64xbf16>, vector<64x128xbf16>, vector<16x128xf32> -> vector<16x128xf32>
    %c0_25 = arith.constant 0 : index
    %c0_26 = arith.constant 0 : index
    %83 = vector.load %arg10[%c0_25, %c0_26] : memref<1x128xf32, #tpu.memory_space<vmem>>, vector<1x128xf32>
    %84 = vector.broadcast %83 : vector<1x128xf32> to vector<16x128xf32>
    %85 = arith.addf %82, %84 : vector<16x128xf32>
    %c0_27 = arith.constant 0 : index
    %c0_28 = arith.constant 0 : index
    %86 = vector.load %arg11[%c0_27, %c0_28] : memref<16x128xf32, #tpu.memory_space<vmem>>, vector<16x128xf32>
    tpu.vector_store %arg11[%c0_27, %c0_28], %85 {strides = array<i32>} : memref<16x128xf32, #tpu.memory_space<vmem>>, vector<16x128xf32>,
    return
  }
  func.func @transform_0(%arg0: i32) -> (i32, i32, i32) {
    %c0_i32 = arith.constant 0 : i32
    %c0_i32_0 = arith.constant 0 : i32
    %c0_i32_1 = arith.constant 0 : i32
    return %c0_i32, %arg0, %c0_i32_0 : i32, i32, i32
  }
  func.func @transform_1(%arg0: i32) -> (i32, i32) {
    %c0_i32 = arith.constant 0 : i32
    %c0_i32_0 = arith.constant 0 : i32
    %c0_i32_1 = arith.constant 0 : i32
    return %c0_i32, %c0_i32_0 : i32, i32
  }
  func.func @transform_2(%arg0: i32) -> (i32, i32) {
    %c0_i32 = arith.constant 0 : i32
    %c0_i32_0 = arith.constant 0 : i32
    %c0_i32_1 = arith.constant 0 : i32
    return %c0_i32, %c0_i32_0 : i32, i32
  }
  func.func @transform_3(%arg0: i32) -> (i32, i32) {
    %c0_i32 = arith.constant 0 : i32
    %c0_i32_0 = arith.constant 0 : i32
    %c0_i32_1 = arith.constant 0 : i32
    return %c0_i32, %c0_i32_0 : i32, i32
  }
  func.func @transform_4(%arg0: i32) -> (i32, i32) {
    %c0_i32 = arith.constant 0 : i32
    %c0_i32_0 = arith.constant 0 : i32
    %c0_i32_1 = arith.constant 0 : i32
    return %c0_i32, %c0_i32_0 : i32, i32
  }
  func.func @transform_5(%arg0: i32) -> (i32, i32) {
    %c0_i32 = arith.constant 0 : i32
    %c0_i32_0 = arith.constant 0 : i32
    %c0_i32_1 = arith.constant 0 : i32
    return %c0_i32, %c0_i32_0 : i32, i32
  }
  func.func @transform_6(%arg0: i32) -> (i32, i32) {
    %c0_i32 = arith.constant 0 : i32
    %c0_i32_0 = arith.constant 0 : i32
    %c0_i32_1 = arith.constant 0 : i32
    return %c0_i32, %c0_i32_0 : i32, i32
  }
  func.func @transform_7(%arg0: i32) -> (i32, i32) {
    %c0_i32 = arith.constant 0 : i32
    %c0_i32_0 = arith.constant 0 : i32
    %c0_i32_1 = arith.constant 0 : i32
    return %c0_i32, %c0_i32_0 : i32, i32
  }
  func.func @transform_8(%arg0: i32) -> (i32, i32) {
    %c0_i32 = arith.constant 0 : i32
    %c0_i32_0 = arith.constant 0 : i32
    %c0_i32_1 = arith.constant 0 : i32
    return %c0_i32, %c0_i32_0 : i32, i32
  }
  func.func @transform_9(%arg0: i32) -> (i32, i32) {
    %c0_i32 = arith.constant 0 : i32
    %c0_i32_0 = arith.constant 0 : i32
    %c0_i32_1 = arith.constant 0 : i32
    return %c0_i32, %c0_i32_0 : i32, i32
  }
  func.func @transform_10(%arg0: i32) -> (i32, i32) {
    %c0_i32 = arith.constant 0 : i32
    %c0_i32_0 = arith.constant 0 : i32
    return %arg0, %c0_i32 : i32, i32
  }
}

</mosaic_0001>

<llo_original>
// kernel: convolutional_model_forward.1
$region0: #{convolutional_model_forward.1}
  #allocation0 [shape = 'u32[]', space=smem, size = 0x4, offset = 0x4, fixed_abs, tag = 'smem constant byte address 0x4 - core index']
  #allocation1 [shape = 'u32[72,128]{1,0:T(1,128)}', space=vmem, size = 0x9000, scoped, tag = 'internal scratch']
  %s0 = inlined_call_operand.vmem [shape: s32[20,16,1], index: 0, kind: input, shape index: {}]
  %s1 = inlined_call_operand.vmem [shape: bf16[128,128], index: 1, kind: input, shape index: {}]
  %s2 = inlined_call_operand.vmem [shape: bf16[384,128], index: 2, kind: input, shape index: {}]
  %s3 = inlined_call_operand.vmem [shape: f32[1,128], index: 3, kind: input, shape index: {}]
  %s4 = inlined_call_operand.vmem [shape: bf16[384,128], index: 4, kind: input, shape index: {}]
  %s5 = inlined_call_operand.vmem [shape: f32[1,128], index: 5, kind: input, shape index: {}]
  %s6 = inlined_call_operand.vmem [shape: bf16[2048,64], index: 6, kind: input, shape index: {}]
  %s7 = inlined_call_operand.vmem [shape: f32[1,64], index: 7, kind: input, shape index: {}]
  %s8 = inlined_call_operand.vmem [shape: bf16[64,128], index: 8, kind: input, shape index: {}]
  %s9 = inlined_call_operand.vmem [shape: f32[1,128], index: 9, kind: input, shape index: {}]
  %s10 = inlined_call_operand.vmem [shape: f32[16,128], index: 10, kind: output, shape index: {}]
  %s11 = sld [smem:[#allocation0]]
  $region50: #{convolutional_model_forward.1} parent=0
    _
  %s13 = ssub.s32 1, %s11
  %s14 = scalar_select 0, %s13, %s11
  // Predicated region
  $region2: #{convolutional_model_forward.1} parent=0 // pred_check
    _
  $region3: #{convolutional_model_forward.1} parent=0 // pred_check_branch
    %16 = sbr.rel (0) target = $region5
  $region4: #{convolutional_model_forward.1} parent=0 // pred_region
    _
  $region5: #{convolutional_model_forward.1} parent=0 // pred_fallthru
    _
  // Predicated region
  $region6: #{convolutional_model_forward.1} parent=0 // pred_check
    _
  $region7: #{convolutional_model_forward.1} parent=0 // pred_check_branch
    %18 = sbr.rel (0) target = $region9
  $region8: #{convolutional_model_forward.1} parent=0 // pred_region
    _
  $region9: #{convolutional_model_forward.1} parent=0 // pred_fallthru
    _
  // Predicated region
  $region10: #{convolutional_model_forward.1} parent=0 // pred_check
    _
  $region11: #{convolutional_model_forward.1} parent=0 // pred_check_branch
    %20 = sbr.rel (0) target = $region13
  $region12: #{convolutional_model_forward.1} parent=0 // pred_region
    _
  $region13: #{convolutional_model_forward.1} parent=0 // pred_fallthru
    _
  // Predicated region
  $region14: #{convolutional_model_forward.1} parent=0 // pred_check
    _
  $region15: #{convolutional_model_forward.1} parent=0 // pred_check_branch
    %22 = sbr.rel (0) target = $region17
  $region16: #{convolutional_model_forward.1} parent=0 // pred_region
    _
  $region17: #{convolutional_model_forward.1} parent=0 // pred_fallthru
    _
  // Predicated region
  $region18: #{convolutional_model_forward.1} parent=0 // pred_check
    _
  $region19: #{convolutional_model_forward.1} parent=0 // pred_check_branch
    %24 = sbr.rel (0) target = $region21
  $region20: #{convolutional_model_forward.1} parent=0 // pred_region
    _
  $region21: #{convolutional_model_forward.1} parent=0 // pred_fallthru
    _
  // Predicated region
  $region22: #{convolutional_model_forward.1} parent=0 // pred_check
    _
  $region23: #{convolutional_model_forward.1} parent=0 // pred_check_branch
    %26 = sbr.rel (0) target = $region25
  $region24: #{convolutional_model_forward.1} parent=0 // pred_region
    _
  $region25: #{convolutional_model_forward.1} parent=0 // pred_fallthru
    _
  // Predicated region
  $region26: #{convolutional_model_forward.1} parent=0 // pred_check
    _
  $region27: #{convolutional_model_forward.1} parent=0 // pred_check_branch
    %28 = sbr.rel (0) target = $region29
  $region28: #{convolutional_model_forward.1} parent=0 // pred_region
    _
  $region29: #{convolutional_model_forward.1} parent=0 // pred_fallthru
    _
  // Predicated region
  $region30: #{convolutional_model_forward.1} parent=0 // pred_check
    _
  $region31: #{convolutional_model_forward.1} parent=0 // pred_check_branch
    %30 = sbr.rel (0) target = $region33
  $region32: #{convolutional_model_forward.1} parent=0 // pred_region
    _
  $region33: #{convolutional_model_forward.1} parent=0 // pred_fallthru
    _
  // Predicated region
  $region34: #{convolutional_model_forward.1} parent=0 // pred_check
    _
  $region35: #{convolutional_model_forward.1} parent=0 // pred_check_branch
    %32 = sbr.rel (0) target = $region37
  $region36: #{convolutional_model_forward.1} parent=0 // pred_region
    _
  $region37: #{convolutional_model_forward.1} parent=0 // pred_fallthru
    _
  // Predicated region
  $region38: #{convolutional_model_forward.1} parent=0 // pred_check
    _
  $region39: #{convolutional_model_forward.1} parent=0 // pred_check_branch
    %34 = sbr.rel (0) target = $region41
  $region40: #{convolutional_model_forward.1} parent=0 // pred_region
    _
  $region41: #{convolutional_model_forward.1} parent=0 // pred_fallthru
    _
  %v36 = vld [vmem:[%s0] sm:$0xff]
  %v37 = vld [vmem:[%s0 + $0x8] sm:$0xff]
  %v38 = vld [vmem:[%s0 + $0x10] sm:$0xff]
  %v39 = vld [vmem:[%s0 + $0x18] sm:$0xff]
  %v40 = vld [vmem:[%s0 + $0x20] sm:$0xff]
  %v41 = vld [vmem:[%s0 + $0x28] sm:$0xff]
  %v42 = vld [vmem:[%s0 + $0x30] sm:$0xff]
  %v43 = vld [vmem:[%s0 + $0x38] sm:$0xff]
  %v44 = vld [vmem:[%s0 + $0x40] sm:$0xff]
  %v45 = vld [vmem:[%s0 + $0x48] sm:$0xff]
  %v46 = vld [vmem:[%s0 + $0x50] sm:$0xff]
  %v47 = vld [vmem:[%s0 + $0x58] sm:$0xff]
  %v48 = vld [vmem:[%s0 + $0x60] sm:$0xff]
  %v49 = vld [vmem:[%s0 + $0x68] sm:$0xff]
  %v50 = vld [vmem:[%s0 + $0x70] sm:$0xff]
  %v51 = vld [vmem:[%s0 + $0x78] sm:$0xff]
  %v52 = vld [vmem:[%s0 + $0x80] sm:$0xff]
  %v53 = vld [vmem:[%s0 + $0x88] sm:$0xff]
  %v54 = vld [vmem:[%s0 + $0x90] sm:$0xff]
  %v55 = vld [vmem:[%s0 + $0x98] sm:$0xff]
  %v56 = vld [vmem:[%s0 + $0xa0] sm:$0xff]
  %v57 = vld [vmem:[%s0 + $0xa8] sm:$0xff]
  %v58 = vld [vmem:[%s0 + $0xb0] sm:$0xff]
  %v59 = vld [vmem:[%s0 + $0xb8] sm:$0xff]
  %v60 = vld [vmem:[%s0 + $0xc0] sm:$0xff]
  %v61 = vld [vmem:[%s0 + $0xc8] sm:$0xff]
  %v62 = vld [vmem:[%s0 + $0xd0] sm:$0xff]
  %v63 = vld [vmem:[%s0 + $0xd8] sm:$0xff]
  %v64 = vld [vmem:[%s0 + $0xe0] sm:$0xff]
  %v65 = vld [vmem:[%s0 + $0xe8] sm:$0xff]
  %v66 = vld [vmem:[%s0 + $0xf0] sm:$0xff]
  %v67 = vld [vmem:[%s0 + $0xf8] sm:$0xff]
  %v68 = vld [vmem:[%s0 + $0x100] sm:$0xff]
  %v69 = vld [vmem:[%s0 + $0x108] sm:$0xff]
  %v70 = vld [vmem:[%s0 + $0x110] sm:$0xff]
  %v71 = vld [vmem:[%s0 + $0x118] sm:$0xff]
  %v72 = vld [vmem:[%s0 + $0x120] sm:$0xff]
  %v73 = vld [vmem:[%s0 + $0x128] sm:$0xff]
  %v74 = vld [vmem:[%s0 + $0x130] sm:$0xff]
  %v75 = vld [vmem:[%s0 + $0x138] sm:$0xff]
  %v76 = vlaneseq
  %v77 = vand.u32 %v76, 127
  %78 = vset.pattern.permute.xlu0 0
  %79 = vperm.xlu0 %78, %v36
  %v80 = vpop.permute.xlu0 %79
  %81 = vset.pattern.permute.xlu0 0
  %82 = vperm.xlu0 %81, %v37
  %v83 = vpop.permute.xlu0 %82
  %84 = vset.pattern.permute.xlu0 0
  %85 = vperm.xlu0 %84, %v38
  %v86 = vpop.permute.xlu0 %85
  %87 = vset.pattern.permute.xlu0 0
  %88 = vperm.xlu0 %87, %v39
  %v89 = vpop.permute.xlu0 %88
  %90 = vset.pattern.permute.xlu0 0
  %91 = vperm.xlu0 %90, %v40
  %v92 = vpop.permute.xlu0 %91
  %93 = vset.pattern.permute.xlu0 0
  %94 = vperm.xlu0 %93, %v41
  %v95 = vpop.permute.xlu0 %94
  %96 = vset.pattern.permute.xlu0 0
  %97 = vperm.xlu0 %96, %v42
  %v98 = vpop.permute.xlu0 %97
  %99 = vset.pattern.permute.xlu0 0
  %100 = vperm.xlu0 %99, %v43
  %v101 = vpop.permute.xlu0 %100
  %102 = vset.pattern.permute.xlu0 0
  %103 = vperm.xlu0 %102, %v44
  %v104 = vpop.permute.xlu0 %103
  %105 = vset.pattern.permute.xlu0 0
  %106 = vperm.xlu0 %105, %v45
  %v107 = vpop.permute.xlu0 %106
  %108 = vset.pattern.permute.xlu0 0
  %109 = vperm.xlu0 %108, %v46
  %v110 = vpop.permute.xlu0 %109
  %111 = vset.pattern.permute.xlu0 0
  %112 = vperm.xlu0 %111, %v47
  %v113 = vpop.permute.xlu0 %112
  %114 = vset.pattern.permute.xlu0 0
  %115 = vperm.xlu0 %114, %v48
  %v116 = vpop.permute.xlu0 %115
  %117 = vset.pattern.permute.xlu0 0
  %118 = vperm.xlu0 %117, %v49
  %v119 = vpop.permute.xlu0 %118
  %120 = vset.pattern.permute.xlu0 0
  %121 = vperm.xlu0 %120, %v50
  %v122 = vpop.permute.xlu0 %121
  %123 = vset.pattern.permute.xlu0 0
  %124 = vperm.xlu0 %123, %v51
  %v125 = vpop.permute.xlu0 %124
  %126 = vset.pattern.permute.xlu0 0
  %127 = vperm.xlu0 %126, %v52
  %v128 = vpop.permute.xlu0 %127
  %129 = vset.pattern.permute.xlu0 0
  %130 = vperm.xlu0 %129, %v53
  %v131 = vpop.permute.xlu0 %130
  %132 = vset.pattern.permute.xlu0 0
  %133 = vperm.xlu0 %132, %v54
  %v134 = vpop.permute.xlu0 %133
  %135 = vset.pattern.permute.xlu0 0
  %136 = vperm.xlu0 %135, %v55
  %v137 = vpop.permute.xlu0 %136
  %138 = vset.pattern.permute.xlu0 0
  %139 = vperm.xlu0 %138, %v56
  %v140 = vpop.permute.xlu0 %139
  %141 = vset.pattern.permute.xlu0 0
  %142 = vperm.xlu0 %141, %v57
  %v143 = vpop.permute.xlu0 %142
  %144 = vset.pattern.permute.xlu0 0
  %145 = vperm.xlu0 %144, %v58
  %v146 = vpop.permute.xlu0 %145
  %147 = vset.pattern.permute.xlu0 0
  %148 = vperm.xlu0 %147, %v59
  %v149 = vpop.permute.xlu0 %148
  %150 = vset.pattern.permute.xlu0 0
  %151 = vperm.xlu0 %150, %v60
  %v152 = vpop.permute.xlu0 %151
  %153 = vset.pattern.permute.xlu0 0
  %154 = vperm.xlu0 %153, %v61
  %v155 = vpop.permute.xlu0 %154
  %156 = vset.pattern.permute.xlu0 0
  %157 = vperm.xlu0 %156, %v62
  %v158 = vpop.permute.xlu0 %157
  %159 = vset.pattern.permute.xlu0 0
  %160 = vperm.xlu0 %159, %v63
  %v161 = vpop.permute.xlu0 %160
  %162 = vset.pattern.permute.xlu0 0
  %163 = vperm.xlu0 %162, %v64
  %v164 = vpop.permute.xlu0 %163
  %165 = vset.pattern.permute.xlu0 0
  %166 = vperm.xlu0 %165, %v65
  %v167 = vpop.permute.xlu0 %166
  %168 = vset.pattern.permute.xlu0 0
  %169 = vperm.xlu0 %168, %v66
  %v170 = vpop.permute.xlu0 %169
  %171 = vset.pattern.permute.xlu0 0
  %172 = vperm.xlu0 %171, %v67
  %v173 = vpop.permute.xlu0 %172
  %174 = vset.pattern.permute.xlu0 0
  %175 = vperm.xlu0 %174, %v68
  %v176 = vpop.permute.xlu0 %175
  %177 = vset.pattern.permute.xlu0 0
  %178 = vperm.xlu0 %177, %v69
  %v179 = vpop.permute.xlu0 %178
  %180 = vset.pattern.permute.xlu0 0
  %181 = vperm.xlu0 %180, %v70
  %v182 = vpop.permute.xlu0 %181
  %183 = vset.pattern.permute.xlu0 0
  %184 = vperm.xlu0 %183, %v71
  %v185 = vpop.permute.xlu0 %184
  %186 = vset.pattern.permute.xlu0 0
  %187 = vperm.xlu0 %186, %v72
  %v188 = vpop.permute.xlu0 %187
  %189 = vset.pattern.permute.xlu0 0
  %190 = vperm.xlu0 %189, %v73
  %v191 = vpop.permute.xlu0 %190
  %192 = vset.pattern.permute.xlu0 0
  %193 = vperm.xlu0 %192, %v74
  %v194 = vpop.permute.xlu0 %193
  %195 = vset.pattern.permute.xlu0 0
  %196 = vperm.xlu0 %195, %v75
  %v197 = vpop.permute.xlu0 %196
  %vm198 = vcmp.eq.s32.totalorder %v80, %v77
  %vm199 = vcmp.eq.s32.totalorder %v83, %v77
  %vm200 = vcmp.eq.s32.totalorder %v86, %v77
  %vm201 = vcmp.eq.s32.totalorder %v89, %v77
  %vm202 = vcmp.eq.s32.totalorder %v92, %v77
  %vm203 = vcmp.eq.s32.totalorder %v95, %v77
  %vm204 = vcmp.eq.s32.totalorder %v98, %v77
  %vm205 = vcmp.eq.s32.totalorder %v101, %v77
  %vm206 = vcmp.eq.s32.totalorder %v104, %v77
  %vm207 = vcmp.eq.s32.totalorder %v107, %v77
  %vm208 = vcmp.eq.s32.totalorder %v110, %v77
  %vm209 = vcmp.eq.s32.totalorder %v113, %v77
  %vm210 = vcmp.eq.s32.totalorder %v116, %v77
  %vm211 = vcmp.eq.s32.totalorder %v119, %v77
  %vm212 = vcmp.eq.s32.totalorder %v122, %v77
  %vm213 = vcmp.eq.s32.totalorder %v125, %v77
  %vm214 = vcmp.eq.s32.totalorder %v128, %v77
  %vm215 = vcmp.eq.s32.totalorder %v131, %v77
  %vm216 = vcmp.eq.s32.totalorder %v134, %v77
  %vm217 = vcmp.eq.s32.totalorder %v137, %v77
  %vm218 = vcmp.eq.s32.totalorder %v140, %v77
  %vm219 = vcmp.eq.s32.totalorder %v143, %v77
  %vm220 = vcmp.eq.s32.totalorder %v146, %v77
  %vm221 = vcmp.eq.s32.totalorder %v149, %v77
  %vm222 = vcmp.eq.s32.totalorder %v152, %v77
  %vm223 = vcmp.eq.s32.totalorder %v155, %v77
  %vm224 = vcmp.eq.s32.totalorder %v158, %v77
  %vm225 = vcmp.eq.s32.totalorder %v161, %v77
  %vm226 = vcmp.eq.s32.totalorder %v164, %v77
  %vm227 = vcmp.eq.s32.totalorder %v167, %v77
  %vm228 = vcmp.eq.s32.totalorder %v170, %v77
  %vm229 = vcmp.eq.s32.totalorder %v173, %v77
  %vm230 = vcmp.eq.s32.totalorder %v176, %v77
  %vm231 = vcmp.eq.s32.totalorder %v179, %v77
  %vm232 = vcmp.eq.s32.totalorder %v182, %v77
  %vm233 = vcmp.eq.s32.totalorder %v185, %v77
  %vm234 = vcmp.eq.s32.totalorder %v188, %v77
  %vm235 = vcmp.eq.s32.totalorder %v191, %v77
  %vm236 = vcmp.eq.s32.totalorder %v194, %v77
  %vm237 = vcmp.eq.s32.totalorder %v197, %v77
  %v238 = vsel %vm198, 1, 0
  %v239 = vsel %vm199, 1, 0
  %v240 = vsel %vm200, 1, 0
  %v241 = vsel %vm201, 1, 0
  %v242 = vsel %vm202, 1, 0
  %v243 = vsel %vm203, 1, 0
  %v244 = vsel %vm204, 1, 0
  %v245 = vsel %vm205, 1, 0
  %v246 = vsel %vm206, 1, 0
  %v247 = vsel %vm207, 1, 0
  %v248 = vsel %vm208, 1, 0
  %v249 = vsel %vm209, 1, 0
  %v250 = vsel %vm210, 1, 0
  %v251 = vsel %vm211, 1, 0
  %v252 = vsel %vm212, 1, 0
  %v253 = vsel %vm213, 1, 0
  %v254 = vsel %vm214, 1, 0
  %v255 = vsel %vm215, 1, 0
  %v256 = vsel %vm216, 1, 0
  %v257 = vsel %vm217, 1, 0
  %v258 = vsel %vm218, 1, 0
  %v259 = vsel %vm219, 1, 0
  %v260 = vsel %vm220, 1, 0
  %v261 = vsel %vm221, 1, 0
  %v262 = vsel %vm222, 1, 0
  %v263 = vsel %vm223, 1, 0
  %v264 = vsel %vm224, 1, 0
  %v265 = vsel %vm225, 1, 0
  %v266 = vsel %vm226, 1, 0
  %v267 = vsel %vm227, 1, 0
  %v268 = vsel %vm228, 1, 0
  %v269 = vsel %vm229, 1, 0
  %v270 = vsel %vm230, 1, 0
  %v271 = vsel %vm231, 1, 0
  %v272 = vsel %vm232, 1, 0
  %v273 = vsel %vm233, 1, 0
  %v274 = vsel %vm234, 1, 0
  %v275 = vsel %vm235, 1, 0
  %v276 = vsel %vm236, 1, 0
  %v277 = vsel %vm237, 1, 0
  %v278 = vcvt.s32.f32 %v238
  %v279 = vcvt.s32.f32 %v239
  %v280 = vcvt.s32.f32 %v240
  %v281 = vcvt.s32.f32 %v241
  %v282 = vcvt.s32.f32 %v242
  %v283 = vcvt.s32.f32 %v243
  %v284 = vcvt.s32.f32 %v244
  %v285 = vcvt.s32.f32 %v245
  %v286 = vcvt.s32.f32 %v246
  %v287 = vcvt.s32.f32 %v247
  %v288 = vcvt.s32.f32 %v248
  %v289 = vcvt.s32.f32 %v249
  %v290 = vcvt.s32.f32 %v250
  %v291 = vcvt.s32.f32 %v251
  %v292 = vcvt.s32.f32 %v252
  %v293 = vcvt.s32.f32 %v253
  %v294 = vcvt.s32.f32 %v254
  %v295 = vcvt.s32.f32 %v255
  %v296 = vcvt.s32.f32 %v256
  %v297 = vcvt.s32.f32 %v257
  %v298 = vcvt.s32.f32 %v258
  %v299 = vcvt.s32.f32 %v259
  %v300 = vcvt.s32.f32 %v260
  %v301 = vcvt.s32.f32 %v261
  %v302 = vcvt.s32.f32 %v262
  %v303 = vcvt.s32.f32 %v263
  %v304 = vcvt.s32.f32 %v264
  %v305 = vcvt.s32.f32 %v265
  %v306 = vcvt.s32.f32 %v266
  %v307 = vcvt.s32.f32 %v267
  %v308 = vcvt.s32.f32 %v268
  %v309 = vcvt.s32.f32 %v269
  %v310 = vcvt.s32.f32 %v270
  %v311 = vcvt.s32.f32 %v271
  %v312 = vcvt.s32.f32 %v272
  %v313 = vcvt.s32.f32 %v273
  %v314 = vcvt.s32.f32 %v274
  %v315 = vcvt.s32.f32 %v275
  %v316 = vcvt.s32.f32 %v276
  %v317 = vcvt.s32.f32 %v277
  %v318 = vpack.c.bf16 %v278, %v278
  %v319 = vpack.c.bf16 %v279, %v279
  %v320 = vpack.c.bf16 %v280, %v280
  %v321 = vpack.c.bf16 %v281, %v281
  %v322 = vpack.c.bf16 %v282, %v282
  %v323 = vpack.c.bf16 %v283, %v283
  %v324 = vpack.c.bf16 %v284, %v284
  %v325 = vpack.c.bf16 %v285, %v285
  %v326 = vpack.c.bf16 %v286, %v286
  %v327 = vpack.c.bf16 %v287, %v287
  %v328 = vpack.c.bf16 %v288, %v288
  %v329 = vpack.c.bf16 %v289, %v289
  %v330 = vpack.c.bf16 %v290, %v290
  %v331 = vpack.c.bf16 %v291, %v291
  %v332 = vpack.c.bf16 %v292, %v292
  %v333 = vpack.c.bf16 %v293, %v293
  %v334 = vpack.c.bf16 %v294, %v294
  %v335 = vpack.c.bf16 %v295, %v295
  %v336 = vpack.c.bf16 %v296, %v296
  %v337 = vpack.c.bf16 %v297, %v297
  %v338 = vpack.c.bf16 %v298, %v298
  %v339 = vpack.c.bf16 %v299, %v299
  %v340 = vpack.c.bf16 %v300, %v300
  %v341 = vpack.c.bf16 %v301, %v301
  %v342 = vpack.c.bf16 %v302, %v302
  %v343 = vpack.c.bf16 %v303, %v303
  %v344 = vpack.c.bf16 %v304, %v304
  %v345 = vpack.c.bf16 %v305, %v305
  %v346 = vpack.c.bf16 %v306, %v306
  %v347 = vpack.c.bf16 %v307, %v307
  %v348 = vpack.c.bf16 %v308, %v308
  %v349 = vpack.c.bf16 %v309, %v309
  %v350 = vpack.c.bf16 %v310, %v310
  %v351 = vpack.c.bf16 %v311, %v311
  %v352 = vpack.c.bf16 %v312, %v312
  %v353 = vpack.c.bf16 %v313, %v313
  %v354 = vpack.c.bf16 %v314, %v314
  %v355 = vpack.c.bf16 %v315, %v315
  %v356 = vpack.c.bf16 %v316, %v316
  %v357 = vpack.c.bf16 %v317, %v317
  %v358 = vld [vmem:[%s1] sm:$0xf]
  %v359 = vld [vmem:[%s1 + $0x4] sm:$0xf]
  %v360 = vld [vmem:[%s1 + $0x8] sm:$0xf]
  %v361 = vld [vmem:[%s1 + $0xc] sm:$0xf]
  %v362 = vld [vmem:[%s1 + $0x10] sm:$0xf]
  %v363 = vld [vmem:[%s1 + $0x14] sm:$0xf]
  %v364 = vld [vmem:[%s1 + $0x18] sm:$0xf]
  %v365 = vld [vmem:[%s1 + $0x1c] sm:$0xf]
  %v366 = vld [vmem:[%s1 + $0x20] sm:$0xf]
  %v367 = vld [vmem:[%s1 + $0x24] sm:$0xf]
  %v368 = vld [vmem:[%s1 + $0x28] sm:$0xf]
  %v369 = vld [vmem:[%s1 + $0x2c] sm:$0xf]
  %v370 = vld [vmem:[%s1 + $0x30] sm:$0xf]
  %v371 = vld [vmem:[%s1 + $0x34] sm:$0xf]
  %v372 = vld [vmem:[%s1 + $0x38] sm:$0xf]
  %v373 = vld [vmem:[%s1 + $0x3c] sm:$0xf]
  %v414 = vunpack.c.l.b16 %v318
  %v415 = vunpack.c.l.b16 %v319
  %v416 = vunpack.c.l.b16 %v320
  %v417 = vunpack.c.l.b16 %v321
  %v418 = vunpack.c.l.b16 %v322
  %v419 = vunpack.c.l.b16 %v323
  %v420 = vunpack.c.l.b16 %v324
  %v421 = vunpack.c.l.b16 %v325
  %v422 = vunpack.c.l.b16 %v326
  %v423 = vunpack.c.l.b16 %v327
  %v424 = vunpack.c.l.b16 %v328
  %v425 = vunpack.c.l.b16 %v329
  %v426 = vunpack.c.l.b16 %v330
  %v427 = vunpack.c.l.b16 %v331
  %v428 = vunpack.c.l.b16 %v332
  %v429 = vunpack.c.l.b16 %v333
  %v430 = vunpack.c.l.b16 %v334
  %v431 = vunpack.c.l.b16 %v335
  %v432 = vunpack.c.l.b16 %v336
  %v433 = vunpack.c.l.b16 %v337
  %v434 = vunpack.c.l.b16 %v338
  %v435 = vunpack.c.l.b16 %v339
  %v436 = vunpack.c.l.b16 %v340
  %v437 = vunpack.c.l.b16 %v341
  %v438 = vunpack.c.l.b16 %v342
  %v439 = vunpack.c.l.b16 %v343
  %v440 = vunpack.c.l.b16 %v344
  %v441 = vunpack.c.l.b16 %v345
  %v442 = vunpack.c.l.b16 %v346
  %v443 = vunpack.c.l.b16 %v347
  %v444 = vunpack.c.l.b16 %v348
  %v445 = vunpack.c.l.b16 %v349
  %v446 = vunpack.c.l.b16 %v350
  %v447 = vunpack.c.l.b16 %v351
  %v448 = vunpack.c.l.b16 %v352
  %v449 = vunpack.c.l.b16 %v353
  %v450 = vunpack.c.l.b16 %v354
  %v451 = vunpack.c.l.b16 %v355
  %v452 = vunpack.c.l.b16 %v356
  %v453 = vunpack.c.l.b16 %v357
  %v454 = vpack.c.b16 %v415, %v414
  %v455 = vpack.c.b16 %v417, %v416
  %v456 = vpack.c.b16 %v419, %v418
  %v457 = vpack.c.b16 %v421, %v420
  %v458 = vpack.c.b16 %v423, %v422
  %v459 = vpack.c.b16 %v425, %v424
  %v460 = vpack.c.b16 %v427, %v426
  %v461 = vpack.c.b16 %v429, %v428
  %v462 = vpack.c.b16 %v431, %v430
  %v463 = vpack.c.b16 %v433, %v432
  %v464 = vpack.c.b16 %v435, %v434
  %v465 = vpack.c.b16 %v437, %v436
  %v466 = vpack.c.b16 %v439, %v438
  %v467 = vpack.c.b16 %v441, %v440
  %v468 = vpack.c.b16 %v443, %v442
  %v469 = vpack.c.b16 %v445, %v444
  %v470 = vpack.c.b16 %v447, %v446
  %v471 = vpack.c.b16 %v449, %v448
  %v472 = vpack.c.b16 %v451, %v450
  %v473 = vpack.c.b16 %v453, %v452
  %v510 = vunpack.c.l.b16 %v358
  %v511 = vunpack.c.l.b16 %v359
  %v512 = vunpack.c.l.b16 %v360
  %v513 = vunpack.c.l.b16 %v361
  %v514 = vunpack.c.l.b16 %v362
  %v515 = vunpack.c.l.b16 %v363
  %v516 = vunpack.c.l.b16 %v364
  %v517 = vunpack.c.l.b16 %v365
  %v518 = vunpack.c.l.b16 %v366
  %v519 = vunpack.c.l.b16 %v367
  %v520 = vunpack.c.l.b16 %v368
  %v521 = vunpack.c.l.b16 %v369
  %v522 = vunpack.c.l.b16 %v370
  %v523 = vunpack.c.l.b16 %v371
  %v524 = vunpack.c.l.b16 %v372
  %v525 = vunpack.c.l.b16 %v373
  %v526 = vpack.c.b16 %v511, %v510
  %v527 = vpack.c.b16 %v513, %v512
  %v528 = vpack.c.b16 %v515, %v514
  %v529 = vpack.c.b16 %v517, %v516
  %v530 = vpack.c.b16 %v519, %v518
  %v531 = vpack.c.b16 %v521, %v520
  %v532 = vpack.c.b16 %v523, %v522
  %v533 = vpack.c.b16 %v525, %v524
  %542 = vmatpush.bf16.msra.mxu0 %v533
  %543 = vmatpush.bf16.msra.mxu0 %v532
  %544 = vmatpush.bf16.msra.mxu0 %v531
  %545 = vmatpush.bf16.msra.mxu0 %v530
  %546 = vmatpush.bf16.msra.mxu0 %v529
  %547 = vmatpush.bf16.msra.mxu0 %v528
  %548 = vmatpush.bf16.msra.mxu0 %v527
  %549 = vmatpush.bf16.msra.mxu0 %v526
  %550 = vmatmul.bf16.gmra.mxu0 %v454
  %v551 = vpop.f32.mrf.mxu0
  %v552 = vadd.f32 0.0, %v551
  %v553 = vpop.f32.mrf.mxu0
  %v554 = vadd.f32 0.0, %v553
  %555 = vmatmul.bf16.gmra.mxu0 %v455
  %v556 = vpop.f32.mrf.mxu0
  %v557 = vadd.f32 0.0, %v556
  %v558 = vpop.f32.mrf.mxu0
  %v559 = vadd.f32 0.0, %v558
  %560 = vmatmul.bf16.gmra.mxu0 %v456
  %v561 = vpop.f32.mrf.mxu0
  %v562 = vadd.f32 0.0, %v561
  %v563 = vpop.f32.mrf.mxu0
  %v564 = vadd.f32 0.0, %v563
  %565 = vmatmul.bf16.gmra.mxu0 %v457
  %v566 = vpop.f32.mrf.mxu0
  %v567 = vadd.f32 0.0, %v566
  %v568 = vpop.f32.mrf.mxu0
  %v569 = vadd.f32 0.0, %v568
  %570 = vmatmul.bf16.gmra.mxu0 %v458
  %v571 = vpop.f32.mrf.mxu0
  %v572 = vadd.f32 0.0, %v571
  %v573 = vpop.f32.mrf.mxu0
  %v574 = vadd.f32 0.0, %v573
  %575 = vmatmul.bf16.gmra.mxu0 %v459
  %v576 = vpop.f32.mrf.mxu0
  %v577 = vadd.f32 0.0, %v576
  %v578 = vpop.f32.mrf.mxu0
  %v579 = vadd.f32 0.0, %v578
  %580 = vmatmul.bf16.gmra.mxu0 %v460
  %v581 = vpop.f32.mrf.mxu0
  %v582 = vadd.f32 0.0, %v581
  %v583 = vpop.f32.mrf.mxu0
  %v584 = vadd.f32 0.0, %v583
  %585 = vmatmul.bf16.gmra.mxu0 %v461
  %v586 = vpop.f32.mrf.mxu0
  %v587 = vadd.f32 0.0, %v586
  %v588 = vpop.f32.mrf.mxu0
  %v589 = vadd.f32 0.0, %v588
  %590 = vmatmul.bf16.gmra.mxu0 %v462
  %v591 = vpop.f32.mrf.mxu0
  %v592 = vadd.f32 0.0, %v591
  %v593 = vpop.f32.mrf.mxu0
  %v594 = vadd.f32 0.0, %v593
  %595 = vmatmul.bf16.gmra.mxu0 %v463
  %v596 = vpop.f32.mrf.mxu0
  %v597 = vadd.f32 0.0, %v596
  %v598 = vpop.f32.mrf.mxu0
  %v599 = vadd.f32 0.0, %v598
  %600 = vmatmul.bf16.gmra.mxu0 %v464
  %v601 = vpop.f32.mrf.mxu0
  %v602 = vadd.f32 0.0, %v601
  %v603 = vpop.f32.mrf.mxu0
  %v604 = vadd.f32 0.0, %v603
  %605 = vmatmul.bf16.gmra.mxu0 %v465
  %v606 = vpop.f32.mrf.mxu0
  %v607 = vadd.f32 0.0, %v606
  %v608 = vpop.f32.mrf.mxu0
  %v609 = vadd.f32 0.0, %v608
  %610 = vmatmul.bf16.gmra.mxu0 %v466
  %v611 = vpop.f32.mrf.mxu0
  %v612 = vadd.f32 0.0, %v611
  %v613 = vpop.f32.mrf.mxu0
  %v614 = vadd.f32 0.0, %v613
  %615 = vmatmul.bf16.gmra.mxu0 %v467
  %v616 = vpop.f32.mrf.mxu0
  %v617 = vadd.f32 0.0, %v616
  %v618 = vpop.f32.mrf.mxu0
  %v619 = vadd.f32 0.0, %v618
  %620 = vmatmul.bf16.gmra.mxu0 %v468
  %v621 = vpop.f32.mrf.mxu0
  %v622 = vadd.f32 0.0, %v621
  %v623 = vpop.f32.mrf.mxu0
  %v624 = vadd.f32 0.0, %v623
  %625 = vmatmul.bf16.gmra.mxu0 %v469
  %v626 = vpop.f32.mrf.mxu0
  %v627 = vadd.f32 0.0, %v626
  %v628 = vpop.f32.mrf.mxu0
  %v629 = vadd.f32 0.0, %v628
  %630 = vmatmul.bf16.gmra.mxu0 %v470
  %v631 = vpop.f32.mrf.mxu0
  %v632 = vadd.f32 0.0, %v631
  %v633 = vpop.f32.mrf.mxu0
  %v634 = vadd.f32 0.0, %v633
  %635 = vmatmul.bf16.gmra.mxu0 %v471
  %v636 = vpop.f32.mrf.mxu0
  %v637 = vadd.f32 0.0, %v636
  %v638 = vpop.f32.mrf.mxu0
  %v639 = vadd.f32 0.0, %v638
  %640 = vmatmul.bf16.gmra.mxu0 %v472
  %v641 = vpop.f32.mrf.mxu0
  %v642 = vadd.f32 0.0, %v641
  %v643 = vpop.f32.mrf.mxu0
  %v644 = vadd.f32 0.0, %v643
  %645 = vmatmul.bf16.gmra.mxu0 %v473
  %v646 = vpop.f32.mrf.mxu0
  %v647 = vadd.f32 0.0, %v646
  %v648 = vpop.f32.mrf.mxu0
  %v649 = vadd.f32 0.0, %v648
  %650 = vdwg.mxu0
  %v651 = vpack.c.bf16 %v552, %v552
  %v652 = vpack.c.bf16 %v554, %v554
  %v653 = vpack.c.bf16 %v557, %v557
  %v654 = vpack.c.bf16 %v559, %v559
  %v655 = vpack.c.bf16 %v562, %v562
  %v656 = vpack.c.bf16 %v564, %v564
  %v657 = vpack.c.bf16 %v567, %v567
  %v658 = vpack.c.bf16 %v569, %v569
  %v659 = vpack.c.bf16 %v572, %v572
  %v660 = vpack.c.bf16 %v574, %v574
  %v661 = vpack.c.bf16 %v577, %v577
  %v662 = vpack.c.bf16 %v579, %v579
  %v663 = vpack.c.bf16 %v582, %v582
  %v664 = vpack.c.bf16 %v584, %v584
  %v665 = vpack.c.bf16 %v587, %v587
  %v666 = vpack.c.bf16 %v589, %v589
  %v667 = vpack.c.bf16 %v592, %v592
  %v668 = vpack.c.bf16 %v594, %v594
  %v669 = vpack.c.bf16 %v597, %v597
  %v670 = vpack.c.bf16 %v599, %v599
  %v671 = vpack.c.bf16 %v602, %v602
  %v672 = vpack.c.bf16 %v604, %v604
  %v673 = vpack.c.bf16 %v607, %v607
  %v674 = vpack.c.bf16 %v609, %v609
  %v675 = vpack.c.bf16 %v612, %v612
  %v676 = vpack.c.bf16 %v614, %v614
  %v677 = vpack.c.bf16 %v617, %v617
  %v678 = vpack.c.bf16 %v619, %v619
  %v679 = vpack.c.bf16 %v622, %v622
  %v680 = vpack.c.bf16 %v624, %v624
  %v681 = vpack.c.bf16 %v627, %v627
  %v682 = vpack.c.bf16 %v629, %v629
  %v683 = vpack.c.bf16 %v632, %v632
  %v684 = vpack.c.bf16 %v634, %v634
  %v685 = vpack.c.bf16 %v637, %v637
  %v686 = vpack.c.bf16 %v639, %v639
  %v687 = vpack.c.bf16 %v642, %v642
  %v688 = vpack.c.bf16 %v644, %v644
  %v689 = vpack.c.bf16 %v647, %v647
  %v690 = vpack.c.bf16 %v649, %v649
  %v727 = vunpack.c.l.b16 %v651
  %v728 = vunpack.c.l.b16 %v652
  %v729 = vunpack.c.l.b16 %v653
  %v730 = vunpack.c.l.b16 %v654
  %v731 = vunpack.c.l.b16 %v655
  %v732 = vunpack.c.l.b16 %v656
  %v733 = vunpack.c.l.b16 %v657
  %v734 = vunpack.c.l.b16 %v658
  %v735 = vunpack.c.l.b16 %v659
  %v736 = vunpack.c.l.b16 %v660
  %v737 = vunpack.c.l.b16 %v661
  %v738 = vunpack.c.l.b16 %v662
  %v739 = vunpack.c.l.b16 %v663
  %v740 = vunpack.c.l.b16 %v664
  %v741 = vunpack.c.l.b16 %v665
  %v742 = vunpack.c.l.b16 %v666
  %v743 = vunpack.c.l.b16 %v667
  %v744 = vunpack.c.l.b16 %v668
  %v745 = vunpack.c.l.b16 %v669
  %v746 = vunpack.c.l.b16 %v670
  %v747 = vunpack.c.l.b16 %v671
  %v748 = vunpack.c.l.b16 %v672
  %v749 = vunpack.c.l.b16 %v673
  %v750 = vunpack.c.l.b16 %v674
  %v751 = vunpack.c.l.b16 %v675
  %v752 = vunpack.c.l.b16 %v676
  %v753 = vunpack.c.l.b16 %v677
  %v754 = vunpack.c.l.b16 %v678
  %v755 = vunpack.c.l.b16 %v679
  %v756 = vunpack.c.l.b16 %v680
  %v757 = vunpack.c.l.b16 %v681
  %v758 = vunpack.c.l.b16 %v682
  %v759 = vunpack.c.l.b16 %v683
  %v760 = vunpack.c.l.b16 %v684
  %v761 = vunpack.c.l.b16 %v685
  %v762 = vunpack.c.l.b16 %v686
  %v763 = vpack.c.b16 %v728, %v727
  %v764 = vpack.c.b16 %v730, %v729
  %v765 = vpack.c.b16 %v732, %v731
  %v766 = vpack.c.b16 %v734, %v733
  %v767 = vpack.c.b16 %v736, %v735
  %v768 = vpack.c.b16 %v738, %v737
  %v769 = vpack.c.b16 %v740, %v739
  %v770 = vpack.c.b16 %v742, %v741
  %v771 = vpack.c.b16 %v744, %v743
  %v772 = vpack.c.b16 %v746, %v745
  %v773 = vpack.c.b16 %v748, %v747
  %v774 = vpack.c.b16 %v750, %v749
  %v775 = vpack.c.b16 %v752, %v751
  %v776 = vpack.c.b16 %v754, %v753
  %v777 = vpack.c.b16 %v756, %v755
  %v778 = vpack.c.b16 %v758, %v757
  %v779 = vpack.c.b16 %v760, %v759
  %v780 = vpack.c.b16 %v762, %v761
  %v801 = vunpack.c.l.b16 %v687
  %v802 = vunpack.c.l.b16 %v688
  %v803 = vpack.c.b16 %v802, %v801
  %v807 = vunpack.c.l.b16 %v689
  %v808 = vunpack.c.l.b16 %v690
  %v809 = vpack.c.b16 %v808, %v807
  %v811 = vld [vmem:[%s2] sm:$0xf]
  %v812 = vld [vmem:[%s2 + $0x4] sm:$0xf]
  %v813 = vld [vmem:[%s2 + $0x8] sm:$0xf]
  %v814 = vld [vmem:[%s2 + $0xc] sm:$0xf]
  %v815 = vld [vmem:[%s2 + $0x10] sm:$0xf]
  %v816 = vld [vmem:[%s2 + $0x14] sm:$0xf]
  %v817 = vld [vmem:[%s2 + $0x18] sm:$0xf]
  %v818 = vld [vmem:[%s2 + $0x1c] sm:$0xf]
  %v819 = vld [vmem:[%s2 + $0x20] sm:$0xf]
  %v820 = vld [vmem:[%s2 + $0x24] sm:$0xf]
  %v821 = vld [vmem:[%s2 + $0x28] sm:$0xf]
  %v822 = vld [vmem:[%s2 + $0x2c] sm:$0xf]
  %v823 = vld [vmem:[%s2 + $0x30] sm:$0xf]
  %v824 = vld [vmem:[%s2 + $0x34] sm:$0xf]
  %v825 = vld [vmem:[%s2 + $0x38] sm:$0xf]
  %v826 = vld [vmem:[%s2 + $0x3c] sm:$0xf]
  %v827 = vld [vmem:[%s2 + $0x40] sm:$0xf]
  %v828 = vld [vmem:[%s2 + $0x44] sm:$0xf]
  %v829 = vld [vmem:[%s2 + $0x48] sm:$0xf]
  %v830 = vld [vmem:[%s2 + $0x4c] sm:$0xf]
  %v831 = vld [vmem:[%s2 + $0x50] sm:$0xf]
  %v832 = vld [vmem:[%s2 + $0x54] sm:$0xf]
  %v833 = vld [vmem:[%s2 + $0x58] sm:$0xf]
  %v834 = vld [vmem:[%s2 + $0x5c] sm:$0xf]
  %v835 = vld [vmem:[%s2 + $0x60] sm:$0xf]
  %v836 = vld [vmem:[%s2 + $0x64] sm:$0xf]
  %v837 = vld [vmem:[%s2 + $0x68] sm:$0xf]
  %v838 = vld [vmem:[%s2 + $0x6c] sm:$0xf]
  %v839 = vld [vmem:[%s2 + $0x70] sm:$0xf]
  %v840 = vld [vmem:[%s2 + $0x74] sm:$0xf]
  %v841 = vld [vmem:[%s2 + $0x78] sm:$0xf]
  %v842 = vld [vmem:[%s2 + $0x7c] sm:$0xf]
  %v843 = vld [vmem:[%s2 + $0x80] sm:$0xf]
  %v844 = vld [vmem:[%s2 + $0x84] sm:$0xf]
  %v845 = vld [vmem:[%s2 + $0x88] sm:$0xf]
  %v846 = vld [vmem:[%s2 + $0x8c] sm:$0xf]
  %v847 = vld [vmem:[%s2 + $0x90] sm:$0xf]
  %v848 = vld [vmem:[%s2 + $0x94] sm:$0xf]
  %v849 = vld [vmem:[%s2 + $0x98] sm:$0xf]
  %v850 = vld [vmem:[%s2 + $0x9c] sm:$0xf]
  %v851 = vld [vmem:[%s2 + $0xa0] sm:$0xf]
  %v852 = vld [vmem:[%s2 + $0xa4] sm:$0xf]
  %v853 = vld [vmem:[%s2 + $0xa8] sm:$0xf]
  %v854 = vld [vmem:[%s2 + $0xac] sm:$0xf]
  %v855 = vld [vmem:[%s2 + $0xb0] sm:$0xf]
  %v856 = vld [vmem:[%s2 + $0xb4] sm:$0xf]
  %v857 = vld [vmem:[%s2 + $0xb8] sm:$0xf]
  %v858 = vld [vmem:[%s2 + $0xbc] sm:$0xf]
  %v859 = vld [vmem:[%s3] sm:$0x1]
  %v861 = vperm.slane %v859, 0
  %v911 = vunpack.c.l.b16 %v811
  %v912 = vunpack.c.l.b16 %v812
  %v913 = vunpack.c.l.b16 %v813
  %v914 = vunpack.c.l.b16 %v814
  %v915 = vunpack.c.l.b16 %v815
  %v916 = vunpack.c.l.b16 %v816
  %v917 = vunpack.c.l.b16 %v817
  %v918 = vunpack.c.l.b16 %v818
  %v919 = vunpack.c.l.b16 %v819
  %v920 = vunpack.c.l.b16 %v820
  %v921 = vunpack.c.l.b16 %v821
  %v922 = vunpack.c.l.b16 %v822
  %v923 = vunpack.c.l.b16 %v823
  %v924 = vunpack.c.l.b16 %v824
  %v925 = vunpack.c.l.b16 %v825
  %v926 = vunpack.c.l.b16 %v826
  %v927 = vunpack.c.l.b16 %v827
  %v928 = vunpack.c.l.b16 %v828
  %v929 = vunpack.c.l.b16 %v829
  %v930 = vunpack.c.l.b16 %v830
  %v931 = vunpack.c.l.b16 %v831
  %v932 = vunpack.c.l.b16 %v832
  %v933 = vunpack.c.l.b16 %v833
  %v934 = vunpack.c.l.b16 %v834
  %v935 = vunpack.c.l.b16 %v835
  %v936 = vunpack.c.l.b16 %v836
  %v937 = vunpack.c.l.b16 %v837
  %v938 = vunpack.c.l.b16 %v838
  %v939 = vunpack.c.l.b16 %v839
  %v940 = vunpack.c.l.b16 %v840
  %v941 = vunpack.c.l.b16 %v841
  %v942 = vunpack.c.l.b16 %v842
  %v943 = vunpack.c.l.b16 %v843
  %v944 = vunpack.c.l.b16 %v844
  %v945 = vunpack.c.l.b16 %v845
  %v946 = vunpack.c.l.b16 %v846
  %v947 = vunpack.c.l.b16 %v847
  %v948 = vunpack.c.l.b16 %v848
  %v949 = vunpack.c.l.b16 %v849
  %v950 = vunpack.c.l.b16 %v850
  %v951 = vunpack.c.l.b16 %v851
  %v952 = vunpack.c.l.b16 %v852
  %v953 = vunpack.c.l.b16 %v853
  %v954 = vunpack.c.l.b16 %v854
  %v955 = vunpack.c.l.b16 %v855
  %v956 = vunpack.c.l.b16 %v856
  %v957 = vunpack.c.l.b16 %v857
  %v958 = vunpack.c.l.b16 %v858
  %v959 = vpack.c.b16 %v912, %v911
  %v960 = vpack.c.b16 %v914, %v913
  %v961 = vpack.c.b16 %v916, %v915
  %v962 = vpack.c.b16 %v918, %v917
  %v963 = vpack.c.b16 %v920, %v919
  %v964 = vpack.c.b16 %v922, %v921
  %v965 = vpack.c.b16 %v924, %v923
  %v966 = vpack.c.b16 %v926, %v925
  %v967 = vpack.c.b16 %v928, %v927
  %v968 = vpack.c.b16 %v930, %v929
  %v969 = vpack.c.b16 %v932, %v931
  %v970 = vpack.c.b16 %v934, %v933
  %v971 = vpack.c.b16 %v936, %v935
  %v972 = vpack.c.b16 %v938, %v937
  %v973 = vpack.c.b16 %v940, %v939
  %v974 = vpack.c.b16 %v942, %v941
  %v975 = vpack.c.b16 %v944, %v943
  %v976 = vpack.c.b16 %v946, %v945
  %v977 = vpack.c.b16 %v948, %v947
  %v978 = vpack.c.b16 %v950, %v949
  %v979 = vpack.c.b16 %v952, %v951
  %v980 = vpack.c.b16 %v954, %v953
  %v981 = vpack.c.b16 %v956, %v955
  %v982 = vpack.c.b16 %v958, %v957
  %1007 = vmatpush.bf16.msra.mxu0 %v966
  %1008 = vmatpush.bf16.msra.mxu0 %v965
  %1009 = vmatpush.bf16.msra.mxu0 %v964
  %1010 = vmatpush.bf16.msra.mxu0 %v963
  %1011 = vmatpush.bf16.msra.mxu0 %v962
  %1012 = vmatpush.bf16.msra.mxu0 %v961
  %1013 = vmatpush.bf16.msra.mxu0 %v960
  %1014 = vmatpush.bf16.msra.mxu0 %v959
  %1015 = vmatmul.bf16.gmra.mxu0 %v763
  %v1016 = vpop.f32.mrf.mxu0
  %v1017 = vadd.f32 %v861, %v1016
  %v1018 = vpop.f32.mrf.mxu0
  %v1019 = vadd.f32 %v861, %v1018
  %1020 = vmatmul.bf16.gmra.mxu0 %v764
  %v1021 = vpop.f32.mrf.mxu0
  %v1022 = vadd.f32 %v861, %v1021
  %v1023 = vpop.f32.mrf.mxu0
  %v1024 = vadd.f32 %v861, %v1023
  %1025 = vmatmul.bf16.gmra.mxu0 %v765
  %v1026 = vpop.f32.mrf.mxu0
  %v1027 = vadd.f32 %v861, %v1026
  %v1028 = vpop.f32.mrf.mxu0
  %v1029 = vadd.f32 %v861, %v1028
  %1030 = vmatmul.bf16.gmra.mxu0 %v766
  %v1031 = vpop.f32.mrf.mxu0
  %v1032 = vadd.f32 %v861, %v1031
  %v1033 = vpop.f32.mrf.mxu0
  %v1034 = vadd.f32 %v861, %v1033
  %1035 = vmatmul.bf16.gmra.mxu0 %v767
  %v1036 = vpop.f32.mrf.mxu0
  %v1037 = vadd.f32 %v861, %v1036
  %v1038 = vpop.f32.mrf.mxu0
  %v1039 = vadd.f32 %v861, %v1038
  %1040 = vmatmul.bf16.gmra.mxu0 %v768
  %v1041 = vpop.f32.mrf.mxu0
  %v1042 = vadd.f32 %v861, %v1041
  %v1043 = vpop.f32.mrf.mxu0
  %v1044 = vadd.f32 %v861, %v1043
  %1045 = vmatmul.bf16.gmra.mxu0 %v769
  %v1046 = vpop.f32.mrf.mxu0
  %v1047 = vadd.f32 %v861, %v1046
  %v1048 = vpop.f32.mrf.mxu0
  %v1049 = vadd.f32 %v861, %v1048
  %1050 = vmatmul.bf16.gmra.mxu0 %v770
  %v1051 = vpop.f32.mrf.mxu0
  %v1052 = vadd.f32 %v861, %v1051
  %v1053 = vpop.f32.mrf.mxu0
  %v1054 = vadd.f32 %v861, %v1053
  %1055 = vmatmul.bf16.gmra.mxu0 %v771
  %v1056 = vpop.f32.mrf.mxu0
  %v1057 = vadd.f32 %v861, %v1056
  %v1058 = vpop.f32.mrf.mxu0
  %v1059 = vadd.f32 %v861, %v1058
  %1060 = vmatmul.bf16.gmra.mxu0 %v772
  %v1061 = vpop.f32.mrf.mxu0
  %v1062 = vadd.f32 %v861, %v1061
  %v1063 = vpop.f32.mrf.mxu0
  %v1064 = vadd.f32 %v861, %v1063
  %1065 = vmatmul.bf16.gmra.mxu0 %v773
  %v1066 = vpop.f32.mrf.mxu0
  %v1067 = vadd.f32 %v861, %v1066
  %v1068 = vpop.f32.mrf.mxu0
  %v1069 = vadd.f32 %v861, %v1068
  %1070 = vmatmul.bf16.gmra.mxu0 %v774
  %v1071 = vpop.f32.mrf.mxu0
  %v1072 = vadd.f32 %v861, %v1071
  %v1073 = vpop.f32.mrf.mxu0
  %v1074 = vadd.f32 %v861, %v1073
  %1075 = vmatmul.bf16.gmra.mxu0 %v775
  %v1076 = vpop.f32.mrf.mxu0
  %v1077 = vadd.f32 %v861, %v1076
  %v1078 = vpop.f32.mrf.mxu0
  %v1079 = vadd.f32 %v861, %v1078
  %1080 = vmatmul.bf16.gmra.mxu0 %v776
  %v1081 = vpop.f32.mrf.mxu0
  %v1082 = vadd.f32 %v861, %v1081
  %v1083 = vpop.f32.mrf.mxu0
  %v1084 = vadd.f32 %v861, %v1083
  %1085 = vmatmul.bf16.gmra.mxu0 %v777
  %v1086 = vpop.f32.mrf.mxu0
  %v1087 = vadd.f32 %v861, %v1086
  %v1088 = vpop.f32.mrf.mxu0
  %v1089 = vadd.f32 %v861, %v1088
  %1090 = vmatmul.bf16.gmra.mxu0 %v778
  %v1091 = vpop.f32.mrf.mxu0
  %v1092 = vadd.f32 %v861, %v1091
  %v1093 = vpop.f32.mrf.mxu0
  %v1094 = vadd.f32 %v861, %v1093
  %1095 = vmatmul.bf16.gmra.mxu0 %v779
  %v1096 = vpop.f32.mrf.mxu0
  %v1097 = vadd.f32 %v861, %v1096
  %v1098 = vpop.f32.mrf.mxu0
  %v1099 = vadd.f32 %v861, %v1098
  %1100 = vmatmul.bf16.gmra.mxu0 %v780
  %v1101 = vpop.f32.mrf.mxu0
  %v1102 = vadd.f32 %v861, %v1101
  %v1103 = vpop.f32.mrf.mxu0
  %v1104 = vadd.f32 %v861, %v1103
  %1105 = vdwg.mxu0
  %1106 = vmatpush.bf16.msra.mxu0 %v974
  %1107 = vmatpush.bf16.msra.mxu0 %v973
  %1108 = vmatpush.bf16.msra.mxu0 %v972
  %1109 = vmatpush.bf16.msra.mxu0 %v971
  %1110 = vmatpush.bf16.msra.mxu0 %v970
  %1111 = vmatpush.bf16.msra.mxu0 %v969
  %1112 = vmatpush.bf16.msra.mxu0 %v968
  %1113 = vmatpush.bf16.msra.mxu0 %v967
  %1114 = vmatmul.bf16.gmra.mxu0 %v764
  %v1115 = vpop.f32.mrf.mxu0
  %v1116 = vadd.f32 %v1017, %v1115
  %v1117 = vpop.f32.mrf.mxu0
  %v1118 = vadd.f32 %v1019, %v1117
  %1119 = vmatmul.bf16.gmra.mxu0 %v765
  %v1120 = vpop.f32.mrf.mxu0
  %v1121 = vadd.f32 %v1022, %v1120
  %v1122 = vpop.f32.mrf.mxu0
  %v1123 = vadd.f32 %v1024, %v1122
  %1124 = vmatmul.bf16.gmra.mxu0 %v766
  %v1125 = vpop.f32.mrf.mxu0
  %v1126 = vadd.f32 %v1027, %v1125
  %v1127 = vpop.f32.mrf.mxu0
  %v1128 = vadd.f32 %v1029, %v1127
  %1129 = vmatmul.bf16.gmra.mxu0 %v767
  %v1130 = vpop.f32.mrf.mxu0
  %v1131 = vadd.f32 %v1032, %v1130
  %v1132 = vpop.f32.mrf.mxu0
  %v1133 = vadd.f32 %v1034, %v1132
  %1134 = vmatmul.bf16.gmra.mxu0 %v768
  %v1135 = vpop.f32.mrf.mxu0
  %v1136 = vadd.f32 %v1037, %v1135
  %v1137 = vpop.f32.mrf.mxu0
  %v1138 = vadd.f32 %v1039, %v1137
  %1139 = vmatmul.bf16.gmra.mxu0 %v769
  %v1140 = vpop.f32.mrf.mxu0
  %v1141 = vadd.f32 %v1042, %v1140
  %v1142 = vpop.f32.mrf.mxu0
  %v1143 = vadd.f32 %v1044, %v1142
  %1144 = vmatmul.bf16.gmra.mxu0 %v770
  %v1145 = vpop.f32.mrf.mxu0
  %v1146 = vadd.f32 %v1047, %v1145
  %v1147 = vpop.f32.mrf.mxu0
  %v1148 = vadd.f32 %v1049, %v1147
  %1149 = vmatmul.bf16.gmra.mxu0 %v771
  %v1150 = vpop.f32.mrf.mxu0
  %v1151 = vadd.f32 %v1052, %v1150
  %v1152 = vpop.f32.mrf.mxu0
  %v1153 = vadd.f32 %v1054, %v1152
  %1154 = vmatmul.bf16.gmra.mxu0 %v772
  %v1155 = vpop.f32.mrf.mxu0
  %v1156 = vadd.f32 %v1057, %v1155
  %v1157 = vpop.f32.mrf.mxu0
  %v1158 = vadd.f32 %v1059, %v1157
  %1159 = vmatmul.bf16.gmra.mxu0 %v773
  %v1160 = vpop.f32.mrf.mxu0
  %v1161 = vadd.f32 %v1062, %v1160
  %v1162 = vpop.f32.mrf.mxu0
  %v1163 = vadd.f32 %v1064, %v1162
  %1164 = vmatmul.bf16.gmra.mxu0 %v774
  %v1165 = vpop.f32.mrf.mxu0
  %v1166 = vadd.f32 %v1067, %v1165
  %v1167 = vpop.f32.mrf.mxu0
  %v1168 = vadd.f32 %v1069, %v1167
  %1169 = vmatmul.bf16.gmra.mxu0 %v775
  %v1170 = vpop.f32.mrf.mxu0
  %v1171 = vadd.f32 %v1072, %v1170
  %v1172 = vpop.f32.mrf.mxu0
  %v1173 = vadd.f32 %v1074, %v1172
  %1174 = vmatmul.bf16.gmra.mxu0 %v776
  %v1175 = vpop.f32.mrf.mxu0
  %v1176 = vadd.f32 %v1077, %v1175
  %v1177 = vpop.f32.mrf.mxu0
  %v1178 = vadd.f32 %v1079, %v1177
  %1179 = vmatmul.bf16.gmra.mxu0 %v777
  %v1180 = vpop.f32.mrf.mxu0
  %v1181 = vadd.f32 %v1082, %v1180
  %v1182 = vpop.f32.mrf.mxu0
  %v1183 = vadd.f32 %v1084, %v1182
  %1184 = vmatmul.bf16.gmra.mxu0 %v778
  %v1185 = vpop.f32.mrf.mxu0
  %v1186 = vadd.f32 %v1087, %v1185
  %v1187 = vpop.f32.mrf.mxu0
  %v1188 = vadd.f32 %v1089, %v1187
  %1189 = vmatmul.bf16.gmra.mxu0 %v779
  %v1190 = vpop.f32.mrf.mxu0
  %v1191 = vadd.f32 %v1092, %v1190
  %v1192 = vpop.f32.mrf.mxu0
  %v1193 = vadd.f32 %v1094, %v1192
  %1194 = vmatmul.bf16.gmra.mxu0 %v780
  %v1195 = vpop.f32.mrf.mxu0
  %v1196 = vadd.f32 %v1097, %v1195
  %v1197 = vpop.f32.mrf.mxu0
  %v1198 = vadd.f32 %v1099, %v1197
  %1199 = vmatmul.bf16.gmra.mxu0 %v803
  %v1200 = vpop.f32.mrf.mxu0
  %v1201 = vadd.f32 %v1102, %v1200
  %v1202 = vpop.f32.mrf.mxu0
  %v1203 = vadd.f32 %v1104, %v1202
  %1204 = vdwg.mxu0
  %1205 = vmatpush.bf16.msra.mxu0 %v982
  %1206 = vmatpush.bf16.msra.mxu0 %v981
  %1207 = vmatpush.bf16.msra.mxu0 %v980
  %1208 = vmatpush.bf16.msra.mxu0 %v979
  %1209 = vmatpush.bf16.msra.mxu0 %v978
  %1210 = vmatpush.bf16.msra.mxu0 %v977
  %1211 = vmatpush.bf16.msra.mxu0 %v976
  %1212 = vmatpush.bf16.msra.mxu0 %v975
  %1213 = vmatmul.bf16.gmra.mxu0 %v765
  %v1214 = vpop.f32.mrf.mxu0
  %v1215 = vadd.f32 %v1116, %v1214
  %v1216 = vpop.f32.mrf.mxu0
  %v1217 = vadd.f32 %v1118, %v1216
  %1218 = vmatmul.bf16.gmra.mxu0 %v766
  %v1219 = vpop.f32.mrf.mxu0
  %v1220 = vadd.f32 %v1121, %v1219
  %v1221 = vpop.f32.mrf.mxu0
  %v1222 = vadd.f32 %v1123, %v1221
  %1223 = vmatmul.bf16.gmra.mxu0 %v767
  %v1224 = vpop.f32.mrf.mxu0
  %v1225 = vadd.f32 %v1126, %v1224
  %v1226 = vpop.f32.mrf.mxu0
  %v1227 = vadd.f32 %v1128, %v1226
  %1228 = vmatmul.bf16.gmra.mxu0 %v768
  %v1229 = vpop.f32.mrf.mxu0
  %v1230 = vadd.f32 %v1131, %v1229
  %v1231 = vpop.f32.mrf.mxu0
  %v1232 = vadd.f32 %v1133, %v1231
  %1233 = vmatmul.bf16.gmra.mxu0 %v769
  %v1234 = vpop.f32.mrf.mxu0
  %v1235 = vadd.f32 %v1136, %v1234
  %v1236 = vpop.f32.mrf.mxu0
  %v1237 = vadd.f32 %v1138, %v1236
  %1238 = vmatmul.bf16.gmra.mxu0 %v770
  %v1239 = vpop.f32.mrf.mxu0
  %v1240 = vadd.f32 %v1141, %v1239
  %v1241 = vpop.f32.mrf.mxu0
  %v1242 = vadd.f32 %v1143, %v1241
  %1243 = vmatmul.bf16.gmra.mxu0 %v771
  %v1244 = vpop.f32.mrf.mxu0
  %v1245 = vadd.f32 %v1146, %v1244
  %v1246 = vpop.f32.mrf.mxu0
  %v1247 = vadd.f32 %v1148, %v1246
  %1248 = vmatmul.bf16.gmra.mxu0 %v772
  %v1249 = vpop.f32.mrf.mxu0
  %v1250 = vadd.f32 %v1151, %v1249
  %v1251 = vpop.f32.mrf.mxu0
  %v1252 = vadd.f32 %v1153, %v1251
  %1253 = vmatmul.bf16.gmra.mxu0 %v773
  %v1254 = vpop.f32.mrf.mxu0
  %v1255 = vadd.f32 %v1156, %v1254
  %v1256 = vpop.f32.mrf.mxu0
  %v1257 = vadd.f32 %v1158, %v1256
  %1258 = vmatmul.bf16.gmra.mxu0 %v774
  %v1259 = vpop.f32.mrf.mxu0
  %v1260 = vadd.f32 %v1161, %v1259
  %v1261 = vpop.f32.mrf.mxu0
  %v1262 = vadd.f32 %v1163, %v1261
  %1263 = vmatmul.bf16.gmra.mxu0 %v775
  %v1264 = vpop.f32.mrf.mxu0
  %v1265 = vadd.f32 %v1166, %v1264
  %v1266 = vpop.f32.mrf.mxu0
  %v1267 = vadd.f32 %v1168, %v1266
  %1268 = vmatmul.bf16.gmra.mxu0 %v776
  %v1269 = vpop.f32.mrf.mxu0
  %v1270 = vadd.f32 %v1171, %v1269
  %v1271 = vpop.f32.mrf.mxu0
  %v1272 = vadd.f32 %v1173, %v1271
  %1273 = vmatmul.bf16.gmra.mxu0 %v777
  %v1274 = vpop.f32.mrf.mxu0
  %v1275 = vadd.f32 %v1176, %v1274
  %v1276 = vpop.f32.mrf.mxu0
  %v1277 = vadd.f32 %v1178, %v1276
  %1278 = vmatmul.bf16.gmra.mxu0 %v778
  %v1279 = vpop.f32.mrf.mxu0
  %v1280 = vadd.f32 %v1181, %v1279
  %v1281 = vpop.f32.mrf.mxu0
  %v1282 = vadd.f32 %v1183, %v1281
  %1283 = vmatmul.bf16.gmra.mxu0 %v779
  %v1284 = vpop.f32.mrf.mxu0
  %v1285 = vadd.f32 %v1186, %v1284
  %v1286 = vpop.f32.mrf.mxu0
  %v1287 = vadd.f32 %v1188, %v1286
  %1288 = vmatmul.bf16.gmra.mxu0 %v780
  %v1289 = vpop.f32.mrf.mxu0
  %v1290 = vadd.f32 %v1191, %v1289
  %v1291 = vpop.f32.mrf.mxu0
  %v1292 = vadd.f32 %v1193, %v1291
  %1293 = vmatmul.bf16.gmra.mxu0 %v803
  %v1294 = vpop.f32.mrf.mxu0
  %v1295 = vadd.f32 %v1196, %v1294
  %v1296 = vpop.f32.mrf.mxu0
  %v1297 = vadd.f32 %v1198, %v1296
  %1298 = vmatmul.bf16.gmra.mxu0 %v809
  %v1299 = vpop.f32.mrf.mxu0
  %v1300 = vadd.f32 %v1201, %v1299
  %v1301 = vpop.f32.mrf.mxu0
  %v1302 = vadd.f32 %v1203, %v1301
  %1303 = vdwg.mxu0
  %v1304 = vmax.f32 %v1215, 0.0
  %v1305 = vmax.f32 %v1217, 0.0
  %v1306 = vmax.f32 %v1220, 0.0
  %v1307 = vmax.f32 %v1222, 0.0
  %v1308 = vmax.f32 %v1225, 0.0
  %v1309 = vmax.f32 %v1227, 0.0
  %v1310 = vmax.f32 %v1230, 0.0
  %v1311 = vmax.f32 %v1232, 0.0
  %v1312 = vmax.f32 %v1235, 0.0
  %v1313 = vmax.f32 %v1237, 0.0
  %v1314 = vmax.f32 %v1240, 0.0
  %v1315 = vmax.f32 %v1242, 0.0
  %v1316 = vmax.f32 %v1245, 0.0
  %v1317 = vmax.f32 %v1247, 0.0
  %v1318 = vmax.f32 %v1250, 0.0
  %v1319 = vmax.f32 %v1252, 0.0
  %v1320 = vmax.f32 %v1255, 0.0
  %v1321 = vmax.f32 %v1257, 0.0
  %v1322 = vmax.f32 %v1260, 0.0
  %v1323 = vmax.f32 %v1262, 0.0
  %v1324 = vmax.f32 %v1265, 0.0
  %v1325 = vmax.f32 %v1267, 0.0
  %v1326 = vmax.f32 %v1270, 0.0
  %v1327 = vmax.f32 %v1272, 0.0
  %v1328 = vmax.f32 %v1275, 0.0
  %v1329 = vmax.f32 %v1277, 0.0
  %v1330 = vmax.f32 %v1280, 0.0
  %v1331 = vmax.f32 %v1282, 0.0
  %v1332 = vmax.f32 %v1285, 0.0
  %v1333 = vmax.f32 %v1287, 0.0
  %v1334 = vmax.f32 %v1290, 0.0
  %v1335 = vmax.f32 %v1292, 0.0
  %v1336 = vmax.f32 %v1295, 0.0
  %v1337 = vmax.f32 %v1297, 0.0
  %v1338 = vmax.f32 %v1300, 0.0
  %v1339 = vmax.f32 %v1302, 0.0
  %v1340 = vpack.c.bf16 %v1304, %v1304
  %v1341 = vpack.c.bf16 %v1305, %v1305
  %v1342 = vpack.c.bf16 %v1306, %v1306
  %v1343 = vpack.c.bf16 %v1307, %v1307
  %v1344 = vpack.c.bf16 %v1308, %v1308
  %v1345 = vpack.c.bf16 %v1309, %v1309
  %v1346 = vpack.c.bf16 %v1310, %v1310
  %v1347 = vpack.c.bf16 %v1311, %v1311
  %v1348 = vpack.c.bf16 %v1312, %v1312
  %v1349 = vpack.c.bf16 %v1313, %v1313
  %v1350 = vpack.c.bf16 %v1314, %v1314
  %v1351 = vpack.c.bf16 %v1315, %v1315
  %v1352 = vpack.c.bf16 %v1316, %v1316
  %v1353 = vpack.c.bf16 %v1317, %v1317
  %v1354 = vpack.c.bf16 %v1318, %v1318
  %v1355 = vpack.c.bf16 %v1319, %v1319
  %v1356 = vpack.c.bf16 %v1320, %v1320
  %v1357 = vpack.c.bf16 %v1321, %v1321
  %v1358 = vpack.c.bf16 %v1322, %v1322
  %v1359 = vpack.c.bf16 %v1323, %v1323
  %v1360 = vpack.c.bf16 %v1324, %v1324
  %v1361 = vpack.c.bf16 %v1325, %v1325
  %v1362 = vpack.c.bf16 %v1326, %v1326
  %v1363 = vpack.c.bf16 %v1327, %v1327
  %v1364 = vpack.c.bf16 %v1328, %v1328
  %v1365 = vpack.c.bf16 %v1329, %v1329
  %v1366 = vpack.c.bf16 %v1330, %v1330
  %v1367 = vpack.c.bf16 %v1331, %v1331
  %v1368 = vpack.c.bf16 %v1332, %v1332
  %v1369 = vpack.c.bf16 %v1333, %v1333
  %v1370 = vpack.c.bf16 %v1334, %v1334
  %v1371 = vpack.c.bf16 %v1335, %v1335
  %v1372 = vpack.c.bf16 %v1336, %v1336
  %v1373 = vpack.c.bf16 %v1337, %v1337
  %v1374 = vpack.c.bf16 %v1338, %v1338
  %v1375 = vpack.c.bf16 %v1339, %v1339
  %v1408 = vunpack.c.l.b16 %v1340
  %v1409 = vunpack.c.l.b16 %v1341
  %v1410 = vunpack.c.l.b16 %v1342
  %v1411 = vunpack.c.l.b16 %v1343
  %v1412 = vunpack.c.l.b16 %v1344
  %v1413 = vunpack.c.l.b16 %v1345
  %v1414 = vunpack.c.l.b16 %v1346
  %v1415 = vunpack.c.l.b16 %v1347
  %v1416 = vunpack.c.l.b16 %v1348
  %v1417 = vunpack.c.l.b16 %v1349
  %v1418 = vunpack.c.l.b16 %v1350
  %v1419 = vunpack.c.l.b16 %v1351
  %v1420 = vunpack.c.l.b16 %v1352
  %v1421 = vunpack.c.l.b16 %v1353
  %v1422 = vunpack.c.l.b16 %v1354
  %v1423 = vunpack.c.l.b16 %v1355
  %v1424 = vunpack.c.l.b16 %v1356
  %v1425 = vunpack.c.l.b16 %v1357
  %v1426 = vunpack.c.l.b16 %v1358
  %v1427 = vunpack.c.l.b16 %v1359
  %v1428 = vunpack.c.l.b16 %v1360
  %v1429 = vunpack.c.l.b16 %v1361
  %v1430 = vunpack.c.l.b16 %v1362
  %v1431 = vunpack.c.l.b16 %v1363
  %v1432 = vunpack.c.l.b16 %v1364
  %v1433 = vunpack.c.l.b16 %v1365
  %v1434 = vunpack.c.l.b16 %v1366
  %v1435 = vunpack.c.l.b16 %v1367
  %v1436 = vunpack.c.l.b16 %v1368
  %v1437 = vunpack.c.l.b16 %v1369
  %v1438 = vunpack.c.l.b16 %v1370
  %v1439 = vunpack.c.l.b16 %v1371
  %v1440 = vpack.c.b16 %v1409, %v1408
  %v1441 = vpack.c.b16 %v1411, %v1410
  %v1442 = vpack.c.b16 %v1413, %v1412
  %v1443 = vpack.c.b16 %v1415, %v1414
  %v1444 = vpack.c.b16 %v1417, %v1416
  %v1445 = vpack.c.b16 %v1419, %v1418
  %v1446 = vpack.c.b16 %v1421, %v1420
  %v1447 = vpack.c.b16 %v1423, %v1422
  %v1448 = vpack.c.b16 %v1425, %v1424
  %v1449 = vpack.c.b16 %v1427, %v1426
  %v1450 = vpack.c.b16 %v1429, %v1428
  %v1451 = vpack.c.b16 %v1431, %v1430
  %v1452 = vpack.c.b16 %v1433, %v1432
  %v1453 = vpack.c.b16 %v1435, %v1434
  %v1454 = vpack.c.b16 %v1437, %v1436
  %v1455 = vpack.c.b16 %v1439, %v1438
  %v1474 = vunpack.c.l.b16 %v1372
  %v1475 = vunpack.c.l.b16 %v1373
  %v1476 = vpack.c.b16 %v1475, %v1474
  %v1480 = vunpack.c.l.b16 %v1374
  %v1481 = vunpack.c.l.b16 %v1375
  %v1482 = vpack.c.b16 %v1481, %v1480
  %v1484 = vld [vmem:[%s4] sm:$0xf]
  %v1485 = vld [vmem:[%s4 + $0x4] sm:$0xf]
  %v1486 = vld [vmem:[%s4 + $0x8] sm:$0xf]
  %v1487 = vld [vmem:[%s4 + $0xc] sm:$0xf]
  %v1488 = vld [vmem:[%s4 + $0x10] sm:$0xf]
  %v1489 = vld [vmem:[%s4 + $0x14] sm:$0xf]
  %v1490 = vld [vmem:[%s4 + $0x18] sm:$0xf]
  %v1491 = vld [vmem:[%s4 + $0x1c] sm:$0xf]
  %v1492 = vld [vmem:[%s4 + $0x20] sm:$0xf]
  %v1493 = vld [vmem:[%s4 + $0x24] sm:$0xf]
  %v1494 = vld [vmem:[%s4 + $0x28] sm:$0xf]
  %v1495 = vld [vmem:[%s4 + $0x2c] sm:$0xf]
  %v1496 = vld [vmem:[%s4 + $0x30] sm:$0xf]
  %v1497 = vld [vmem:[%s4 + $0x34] sm:$0xf]
  %v1498 = vld [vmem:[%s4 + $0x38] sm:$0xf]
  %v1499 = vld [vmem:[%s4 + $0x3c] sm:$0xf]
  %v1500 = vld [vmem:[%s4 + $0x40] sm:$0xf]
  %v1501 = vld [vmem:[%s4 + $0x44] sm:$0xf]
  %v1502 = vld [vmem:[%s4 + $0x48] sm:$0xf]
  %v1503 = vld [vmem:[%s4 + $0x4c] sm:$0xf]
  %v1504 = vld [vmem:[%s4 + $0x50] sm:$0xf]
  %v1505 = vld [vmem:[%s4 + $0x54] sm:$0xf]
  %v1506 = vld [vmem:[%s4 + $0x58] sm:$0xf]
  %v1507 = vld [vmem:[%s4 + $0x5c] sm:$0xf]
  %v1508 = vld [vmem:[%s4 + $0x60] sm:$0xf]
  %v1509 = vld [vmem:[%s4 + $0x64] sm:$0xf]
  %v1510 = vld [vmem:[%s4 + $0x68] sm:$0xf]
  %v1511 = vld [vmem:[%s4 + $0x6c] sm:$0xf]
  %v1512 = vld [vmem:[%s4 + $0x70] sm:$0xf]
  %v1513 = vld [vmem:[%s4 + $0x74] sm:$0xf]
  %v1514 = vld [vmem:[%s4 + $0x78] sm:$0xf]
  %v1515 = vld [vmem:[%s4 + $0x7c] sm:$0xf]
  %v1516 = vld [vmem:[%s4 + $0x80] sm:$0xf]
  %v1517 = vld [vmem:[%s4 + $0x84] sm:$0xf]
  %v1518 = vld [vmem:[%s4 + $0x88] sm:$0xf]
  %v1519 = vld [vmem:[%s4 + $0x8c] sm:$0xf]
  %v1520 = vld [vmem:[%s4 + $0x90] sm:$0xf]
  %v1521 = vld [vmem:[%s4 + $0x94] sm:$0xf]
  %v1522 = vld [vmem:[%s4 + $0x98] sm:$0xf]
  %v1523 = vld [vmem:[%s4 + $0x9c] sm:$0xf]
  %v1524 = vld [vmem:[%s4 + $0xa0] sm:$0xf]
  %v1525 = vld [vmem:[%s4 + $0xa4] sm:$0xf]
  %v1526 = vld [vmem:[%s4 + $0xa8] sm:$0xf]
  %v1527 = vld [vmem:[%s4 + $0xac] sm:$0xf]
  %v1528 = vld [vmem:[%s4 + $0xb0] sm:$0xf]
  %v1529 = vld [vmem:[%s4 + $0xb4] sm:$0xf]
  %v1530 = vld [vmem:[%s4 + $0xb8] sm:$0xf]
  %v1531 = vld [vmem:[%s4 + $0xbc] sm:$0xf]
  %v1532 = vld [vmem:[%s5] sm:$0x1]
  %v1534 = vperm.slane %v1532, 0
  %v1584 = vunpack.c.l.b16 %v1484
  %v1585 = vunpack.c.l.b16 %v1485
  %v1586 = vunpack.c.l.b16 %v1486
  %v1587 = vunpack.c.l.b16 %v1487
  %v1588 = vunpack.c.l.b16 %v1488
  %v1589 = vunpack.c.l.b16 %v1489
  %v1590 = vunpack.c.l.b16 %v1490
  %v1591 = vunpack.c.l.b16 %v1491
  %v1592 = vunpack.c.l.b16 %v1492
  %v1593 = vunpack.c.l.b16 %v1493
  %v1594 = vunpack.c.l.b16 %v1494
  %v1595 = vunpack.c.l.b16 %v1495
  %v1596 = vunpack.c.l.b16 %v1496
  %v1597 = vunpack.c.l.b16 %v1497
  %v1598 = vunpack.c.l.b16 %v1498
  %v1599 = vunpack.c.l.b16 %v1499
  %v1600 = vunpack.c.l.b16 %v1500
  %v1601 = vunpack.c.l.b16 %v1501
  %v1602 = vunpack.c.l.b16 %v1502
  %v1603 = vunpack.c.l.b16 %v1503
  %v1604 = vunpack.c.l.b16 %v1504
  %v1605 = vunpack.c.l.b16 %v1505
  %v1606 = vunpack.c.l.b16 %v1506
  %v1607 = vunpack.c.l.b16 %v1507
  %v1608 = vunpack.c.l.b16 %v1508
  %v1609 = vunpack.c.l.b16 %v1509
  %v1610 = vunpack.c.l.b16 %v1510
  %v1611 = vunpack.c.l.b16 %v1511
  %v1612 = vunpack.c.l.b16 %v1512
  %v1613 = vunpack.c.l.b16 %v1513
  %v1614 = vunpack.c.l.b16 %v1514
  %v1615 = vunpack.c.l.b16 %v1515
  %v1616 = vunpack.c.l.b16 %v1516
  %v1617 = vunpack.c.l.b16 %v1517
  %v1618 = vunpack.c.l.b16 %v1518
  %v1619 = vunpack.c.l.b16 %v1519
  %v1620 = vunpack.c.l.b16 %v1520
  %v1621 = vunpack.c.l.b16 %v1521
  %v1622 = vunpack.c.l.b16 %v1522
  %v1623 = vunpack.c.l.b16 %v1523
  %v1624 = vunpack.c.l.b16 %v1524
  %v1625 = vunpack.c.l.b16 %v1525
  %v1626 = vunpack.c.l.b16 %v1526
  %v1627 = vunpack.c.l.b16 %v1527
  %v1628 = vunpack.c.l.b16 %v1528
  %v1629 = vunpack.c.l.b16 %v1529
  %v1630 = vunpack.c.l.b16 %v1530
  %v1631 = vunpack.c.l.b16 %v1531
  %v1632 = vpack.c.b16 %v1585, %v1584
  %v1633 = vpack.c.b16 %v1587, %v1586
  %v1634 = vpack.c.b16 %v1589, %v1588
  %v1635 = vpack.c.b16 %v1591, %v1590
  %v1636 = vpack.c.b16 %v1593, %v1592
  %v1637 = vpack.c.b16 %v1595, %v1594
  %v1638 = vpack.c.b16 %v1597, %v1596
  %v1639 = vpack.c.b16 %v1599, %v1598
  %v1640 = vpack.c.b16 %v1601, %v1600
  %v1641 = vpack.c.b16 %v1603, %v1602
  %v1642 = vpack.c.b16 %v1605, %v1604
  %v1643 = vpack.c.b16 %v1607, %v1606
  %v1644 = vpack.c.b16 %v1609, %v1608
  %v1645 = vpack.c.b16 %v1611, %v1610
  %v1646 = vpack.c.b16 %v1613, %v1612
  %v1647 = vpack.c.b16 %v1615, %v1614
  %v1648 = vpack.c.b16 %v1617, %v1616
  %v1649 = vpack.c.b16 %v1619, %v1618
  %v1650 = vpack.c.b16 %v1621, %v1620
  %v1651 = vpack.c.b16 %v1623, %v1622
  %v1652 = vpack.c.b16 %v1625, %v1624
  %v1653 = vpack.c.b16 %v1627, %v1626
  %v1654 = vpack.c.b16 %v1629, %v1628
  %v1655 = vpack.c.b16 %v1631, %v1630
  %1680 = vmatpush.bf16.msra.mxu0 %v1639
  %1681 = vmatpush.bf16.msra.mxu0 %v1638
  %1682 = vmatpush.bf16.msra.mxu0 %v1637
  %1683 = vmatpush.bf16.msra.mxu0 %v1636
  %1684 = vmatpush.bf16.msra.mxu0 %v1635
  %1685 = vmatpush.bf16.msra.mxu0 %v1634
  %1686 = vmatpush.bf16.msra.mxu0 %v1633
  %1687 = vmatpush.bf16.msra.mxu0 %v1632
  %1688 = vmatmul.bf16.gmra.mxu0 %v1440
  %v1689 = vpop.f32.mrf.mxu0
  %v1690 = vadd.f32 %v1534, %v1689
  %v1691 = vpop.f32.mrf.mxu0
  %v1692 = vadd.f32 %v1534, %v1691
  %1693 = vmatmul.bf16.gmra.mxu0 %v1441
  %v1694 = vpop.f32.mrf.mxu0
  %v1695 = vadd.f32 %v1534, %v1694
  %v1696 = vpop.f32.mrf.mxu0
  %v1697 = vadd.f32 %v1534, %v1696
  %1698 = vmatmul.bf16.gmra.mxu0 %v1442
  %v1699 = vpop.f32.mrf.mxu0
  %v1700 = vadd.f32 %v1534, %v1699
  %v1701 = vpop.f32.mrf.mxu0
  %v1702 = vadd.f32 %v1534, %v1701
  %1703 = vmatmul.bf16.gmra.mxu0 %v1443
  %v1704 = vpop.f32.mrf.mxu0
  %v1705 = vadd.f32 %v1534, %v1704
  %v1706 = vpop.f32.mrf.mxu0
  %v1707 = vadd.f32 %v1534, %v1706
  %1708 = vmatmul.bf16.gmra.mxu0 %v1444
  %v1709 = vpop.f32.mrf.mxu0
  %v1710 = vadd.f32 %v1534, %v1709
  %v1711 = vpop.f32.mrf.mxu0
  %v1712 = vadd.f32 %v1534, %v1711
  %1713 = vmatmul.bf16.gmra.mxu0 %v1445
  %v1714 = vpop.f32.mrf.mxu0
  %v1715 = vadd.f32 %v1534, %v1714
  %v1716 = vpop.f32.mrf.mxu0
  %v1717 = vadd.f32 %v1534, %v1716
  %1718 = vmatmul.bf16.gmra.mxu0 %v1446
  %v1719 = vpop.f32.mrf.mxu0
  %v1720 = vadd.f32 %v1534, %v1719
  %v1721 = vpop.f32.mrf.mxu0
  %v1722 = vadd.f32 %v1534, %v1721
  %1723 = vmatmul.bf16.gmra.mxu0 %v1447
  %v1724 = vpop.f32.mrf.mxu0
  %v1725 = vadd.f32 %v1534, %v1724
  %v1726 = vpop.f32.mrf.mxu0
  %v1727 = vadd.f32 %v1534, %v1726
  %1728 = vmatmul.bf16.gmra.mxu0 %v1448
  %v1729 = vpop.f32.mrf.mxu0
  %v1730 = vadd.f32 %v1534, %v1729
  %v1731 = vpop.f32.mrf.mxu0
  %v1732 = vadd.f32 %v1534, %v1731
  %1733 = vmatmul.bf16.gmra.mxu0 %v1449
  %v1734 = vpop.f32.mrf.mxu0
  %v1735 = vadd.f32 %v1534, %v1734
  %v1736 = vpop.f32.mrf.mxu0
  %v1737 = vadd.f32 %v1534, %v1736
  %1738 = vmatmul.bf16.gmra.mxu0 %v1450
  %v1739 = vpop.f32.mrf.mxu0
  %v1740 = vadd.f32 %v1534, %v1739
  %v1741 = vpop.f32.mrf.mxu0
  %v1742 = vadd.f32 %v1534, %v1741
  %1743 = vmatmul.bf16.gmra.mxu0 %v1451
  %v1744 = vpop.f32.mrf.mxu0
  %v1745 = vadd.f32 %v1534, %v1744
  %v1746 = vpop.f32.mrf.mxu0
  %v1747 = vadd.f32 %v1534, %v1746
  %1748 = vmatmul.bf16.gmra.mxu0 %v1452
  %v1749 = vpop.f32.mrf.mxu0
  %v1750 = vadd.f32 %v1534, %v1749
  %v1751 = vpop.f32.mrf.mxu0
  %v1752 = vadd.f32 %v1534, %v1751
  %1753 = vmatmul.bf16.gmra.mxu0 %v1453
  %v1754 = vpop.f32.mrf.mxu0
  %v1755 = vadd.f32 %v1534, %v1754
  %v1756 = vpop.f32.mrf.mxu0
  %v1757 = vadd.f32 %v1534, %v1756
  %1758 = vmatmul.bf16.gmra.mxu0 %v1454
  %v1759 = vpop.f32.mrf.mxu0
  %v1760 = vadd.f32 %v1534, %v1759
  %v1761 = vpop.f32.mrf.mxu0
  %v1762 = vadd.f32 %v1534, %v1761
  %1763 = vmatmul.bf16.gmra.mxu0 %v1455
  %v1764 = vpop.f32.mrf.mxu0
  %v1765 = vadd.f32 %v1534, %v1764
  %v1766 = vpop.f32.mrf.mxu0
  %v1767 = vadd.f32 %v1534, %v1766
  %1768 = vdwg.mxu0
  %1769 = vmatpush.bf16.msra.mxu0 %v1647
  %1770 = vmatpush.bf16.msra.mxu0 %v1646
  %1771 = vmatpush.bf16.msra.mxu0 %v1645
  %1772 = vmatpush.bf16.msra.mxu0 %v1644
  %1773 = vmatpush.bf16.msra.mxu0 %v1643
  %1774 = vmatpush.bf16.msra.mxu0 %v1642
  %1775 = vmatpush.bf16.msra.mxu0 %v1641
  %1776 = vmatpush.bf16.msra.mxu0 %v1640
  %1777 = vmatmul.bf16.gmra.mxu0 %v1441
  %v1778 = vpop.f32.mrf.mxu0
  %v1779 = vadd.f32 %v1690, %v1778
  %v1780 = vpop.f32.mrf.mxu0
  %v1781 = vadd.f32 %v1692, %v1780
  %1782 = vmatmul.bf16.gmra.mxu0 %v1442
  %v1783 = vpop.f32.mrf.mxu0
  %v1784 = vadd.f32 %v1695, %v1783
  %v1785 = vpop.f32.mrf.mxu0
  %v1786 = vadd.f32 %v1697, %v1785
  %1787 = vmatmul.bf16.gmra.mxu0 %v1443
  %v1788 = vpop.f32.mrf.mxu0
  %v1789 = vadd.f32 %v1700, %v1788
  %v1790 = vpop.f32.mrf.mxu0
  %v1791 = vadd.f32 %v1702, %v1790
  %1792 = vmatmul.bf16.gmra.mxu0 %v1444
  %v1793 = vpop.f32.mrf.mxu0
  %v1794 = vadd.f32 %v1705, %v1793
  %v1795 = vpop.f32.mrf.mxu0
  %v1796 = vadd.f32 %v1707, %v1795
  %1797 = vmatmul.bf16.gmra.mxu0 %v1445
  %v1798 = vpop.f32.mrf.mxu0
  %v1799 = vadd.f32 %v1710, %v1798
  %v1800 = vpop.f32.mrf.mxu0
  %v1801 = vadd.f32 %v1712, %v1800
  %1802 = vmatmul.bf16.gmra.mxu0 %v1446
  %v1803 = vpop.f32.mrf.mxu0
  %v1804 = vadd.f32 %v1715, %v1803
  %v1805 = vpop.f32.mrf.mxu0
  %v1806 = vadd.f32 %v1717, %v1805
  %1807 = vmatmul.bf16.gmra.mxu0 %v1447
  %v1808 = vpop.f32.mrf.mxu0
  %v1809 = vadd.f32 %v1720, %v1808
  %v1810 = vpop.f32.mrf.mxu0
  %v1811 = vadd.f32 %v1722, %v1810
  %1812 = vmatmul.bf16.gmra.mxu0 %v1448
  %v1813 = vpop.f32.mrf.mxu0
  %v1814 = vadd.f32 %v1725, %v1813
  %v1815 = vpop.f32.mrf.mxu0
  %v1816 = vadd.f32 %v1727, %v1815
  %1817 = vmatmul.bf16.gmra.mxu0 %v1449
  %v1818 = vpop.f32.mrf.mxu0
  %v1819 = vadd.f32 %v1730, %v1818
  %v1820 = vpop.f32.mrf.mxu0
  %v1821 = vadd.f32 %v1732, %v1820
  %1822 = vmatmul.bf16.gmra.mxu0 %v1450
  %v1823 = vpop.f32.mrf.mxu0
  %v1824 = vadd.f32 %v1735, %v1823
  %v1825 = vpop.f32.mrf.mxu0
  %v1826 = vadd.f32 %v1737, %v1825
  %1827 = vmatmul.bf16.gmra.mxu0 %v1451
  %v1828 = vpop.f32.mrf.mxu0
  %v1829 = vadd.f32 %v1740, %v1828
  %v1830 = vpop.f32.mrf.mxu0
  %v1831 = vadd.f32 %v1742, %v1830
  %1832 = vmatmul.bf16.gmra.mxu0 %v1452
  %v1833 = vpop.f32.mrf.mxu0
  %v1834 = vadd.f32 %v1745, %v1833
  %v1835 = vpop.f32.mrf.mxu0
  %v1836 = vadd.f32 %v1747, %v1835
  %1837 = vmatmul.bf16.gmra.mxu0 %v1453
  %v1838 = vpop.f32.mrf.mxu0
  %v1839 = vadd.f32 %v1750, %v1838
  %v1840 = vpop.f32.mrf.mxu0
  %v1841 = vadd.f32 %v1752, %v1840
  %1842 = vmatmul.bf16.gmra.mxu0 %v1454
  %v1843 = vpop.f32.mrf.mxu0
  %v1844 = vadd.f32 %v1755, %v1843
  %v1845 = vpop.f32.mrf.mxu0
  %v1846 = vadd.f32 %v1757, %v1845
  %1847 = vmatmul.bf16.gmra.mxu0 %v1455
  %v1848 = vpop.f32.mrf.mxu0
  %v1849 = vadd.f32 %v1760, %v1848
  %v1850 = vpop.f32.mrf.mxu0
  %v1851 = vadd.f32 %v1762, %v1850
  %1852 = vmatmul.bf16.gmra.mxu0 %v1476
  %v1853 = vpop.f32.mrf.mxu0
  %v1854 = vadd.f32 %v1765, %v1853
  %v1855 = vpop.f32.mrf.mxu0
  %v1856 = vadd.f32 %v1767, %v1855
  %1857 = vdwg.mxu0
  %1858 = vmatpush.bf16.msra.mxu0 %v1655
  %1859 = vmatpush.bf16.msra.mxu0 %v1654
  %1860 = vmatpush.bf16.msra.mxu0 %v1653
  %1861 = vmatpush.bf16.msra.mxu0 %v1652
  %1862 = vmatpush.bf16.msra.mxu0 %v1651
  %1863 = vmatpush.bf16.msra.mxu0 %v1650
  %1864 = vmatpush.bf16.msra.mxu0 %v1649
  %1865 = vmatpush.bf16.msra.mxu0 %v1648
  %1866 = vmatmul.bf16.gmra.mxu0 %v1442
  %v1867 = vpop.f32.mrf.mxu0
  %v1868 = vadd.f32 %v1779, %v1867
  %v1869 = vpop.f32.mrf.mxu0
  %v1870 = vadd.f32 %v1781, %v1869
  %1871 = vmatmul.bf16.gmra.mxu0 %v1443
  %v1872 = vpop.f32.mrf.mxu0
  %v1873 = vadd.f32 %v1784, %v1872
  %v1874 = vpop.f32.mrf.mxu0
  %v1875 = vadd.f32 %v1786, %v1874
  %1876 = vmatmul.bf16.gmra.mxu0 %v1444
  %v1877 = vpop.f32.mrf.mxu0
  %v1878 = vadd.f32 %v1789, %v1877
  %v1879 = vpop.f32.mrf.mxu0
  %v1880 = vadd.f32 %v1791, %v1879
  %1881 = vmatmul.bf16.gmra.mxu0 %v1445
  %v1882 = vpop.f32.mrf.mxu0
  %v1883 = vadd.f32 %v1794, %v1882
  %v1884 = vpop.f32.mrf.mxu0
  %v1885 = vadd.f32 %v1796, %v1884
  %1886 = vmatmul.bf16.gmra.mxu0 %v1446
  %v1887 = vpop.f32.mrf.mxu0
  %v1888 = vadd.f32 %v1799, %v1887
  %v1889 = vpop.f32.mrf.mxu0
  %v1890 = vadd.f32 %v1801, %v1889
  %1891 = vmatmul.bf16.gmra.mxu0 %v1447
  %v1892 = vpop.f32.mrf.mxu0
  %v1893 = vadd.f32 %v1804, %v1892
  %v1894 = vpop.f32.mrf.mxu0
  %v1895 = vadd.f32 %v1806, %v1894
  %1896 = vmatmul.bf16.gmra.mxu0 %v1448
  %v1897 = vpop.f32.mrf.mxu0
  %v1898 = vadd.f32 %v1809, %v1897
  %v1899 = vpop.f32.mrf.mxu0
  %v1900 = vadd.f32 %v1811, %v1899
  %1901 = vmatmul.bf16.gmra.mxu0 %v1449
  %v1902 = vpop.f32.mrf.mxu0
  %v1903 = vadd.f32 %v1814, %v1902
  %v1904 = vpop.f32.mrf.mxu0
  %v1905 = vadd.f32 %v1816, %v1904
  %1906 = vmatmul.bf16.gmra.mxu0 %v1450
  %v1907 = vpop.f32.mrf.mxu0
  %v1908 = vadd.f32 %v1819, %v1907
  %v1909 = vpop.f32.mrf.mxu0
  %v1910 = vadd.f32 %v1821, %v1909
  %1911 = vmatmul.bf16.gmra.mxu0 %v1451
  %v1912 = vpop.f32.mrf.mxu0
  %v1913 = vadd.f32 %v1824, %v1912
  %v1914 = vpop.f32.mrf.mxu0
  %v1915 = vadd.f32 %v1826, %v1914
  %1916 = vmatmul.bf16.gmra.mxu0 %v1452
  %v1917 = vpop.f32.mrf.mxu0
  %v1918 = vadd.f32 %v1829, %v1917
  %v1919 = vpop.f32.mrf.mxu0
  %v1920 = vadd.f32 %v1831, %v1919
  %1921 = vmatmul.bf16.gmra.mxu0 %v1453
  %v1922 = vpop.f32.mrf.mxu0
  %v1923 = vadd.f32 %v1834, %v1922
  %v1924 = vpop.f32.mrf.mxu0
  %v1925 = vadd.f32 %v1836, %v1924
  %1926 = vmatmul.bf16.gmra.mxu0 %v1454
  %v1927 = vpop.f32.mrf.mxu0
  %v1928 = vadd.f32 %v1839, %v1927
  %v1929 = vpop.f32.mrf.mxu0
  %v1930 = vadd.f32 %v1841, %v1929
  %1931 = vmatmul.bf16.gmra.mxu0 %v1455
  %v1932 = vpop.f32.mrf.mxu0
  %v1933 = vadd.f32 %v1844, %v1932
  %v1934 = vpop.f32.mrf.mxu0
  %v1935 = vadd.f32 %v1846, %v1934
  %1936 = vmatmul.bf16.gmra.mxu0 %v1476
  %v1937 = vpop.f32.mrf.mxu0
  %v1938 = vadd.f32 %v1849, %v1937
  %v1939 = vpop.f32.mrf.mxu0
  %v1940 = vadd.f32 %v1851, %v1939
  %1941 = vmatmul.bf16.gmra.mxu0 %v1482
  %v1942 = vpop.f32.mrf.mxu0
  %v1943 = vadd.f32 %v1854, %v1942
  %v1944 = vpop.f32.mrf.mxu0
  %v1945 = vadd.f32 %v1856, %v1944
  %1946 = vdwg.mxu0
  %v1947 = vmax.f32 %v1868, 0.0
  %v1948 = vmax.f32 %v1870, 0.0
  %v1949 = vmax.f32 %v1873, 0.0
  %v1950 = vmax.f32 %v1875, 0.0
  %v1951 = vmax.f32 %v1878, 0.0
  %v1952 = vmax.f32 %v1880, 0.0
  %v1953 = vmax.f32 %v1883, 0.0
  %v1954 = vmax.f32 %v1885, 0.0
  %v1955 = vmax.f32 %v1888, 0.0
  %v1956 = vmax.f32 %v1890, 0.0
  %v1957 = vmax.f32 %v1893, 0.0
  %v1958 = vmax.f32 %v1895, 0.0
  %v1959 = vmax.f32 %v1898, 0.0
  %v1960 = vmax.f32 %v1900, 0.0
  %v1961 = vmax.f32 %v1903, 0.0
  %v1962 = vmax.f32 %v1905, 0.0
  %v1963 = vmax.f32 %v1908, 0.0
  %v1964 = vmax.f32 %v1910, 0.0
  %v1965 = vmax.f32 %v1913, 0.0
  %v1966 = vmax.f32 %v1915, 0.0
  %v1967 = vmax.f32 %v1918, 0.0
  %v1968 = vmax.f32 %v1920, 0.0
  %v1969 = vmax.f32 %v1923, 0.0
  %v1970 = vmax.f32 %v1925, 0.0
  %v1971 = vmax.f32 %v1928, 0.0
  %v1972 = vmax.f32 %v1930, 0.0
  %v1973 = vmax.f32 %v1933, 0.0
  %v1974 = vmax.f32 %v1935, 0.0
  %v1975 = vmax.f32 %v1938, 0.0
  %v1976 = vmax.f32 %v1940, 0.0
  %v1977 = vmax.f32 %v1943, 0.0
  %v1978 = vmax.f32 %v1945, 0.0
  %v1979 = vpack.c.bf16 %v1947, %v1947
  %v1980 = vpack.c.bf16 %v1948, %v1948
  %v1981 = vpack.c.bf16 %v1949, %v1949
  %v1982 = vpack.c.bf16 %v1950, %v1950
  %v1983 = vpack.c.bf16 %v1951, %v1951
  %v1984 = vpack.c.bf16 %v1952, %v1952
  %v1985 = vpack.c.bf16 %v1953, %v1953
  %v1986 = vpack.c.bf16 %v1954, %v1954
  %v1987 = vpack.c.bf16 %v1955, %v1955
  %v1988 = vpack.c.bf16 %v1956, %v1956
  %v1989 = vpack.c.bf16 %v1957, %v1957
  %v1990 = vpack.c.bf16 %v1958, %v1958
  %v1991 = vpack.c.bf16 %v1959, %v1959
  %v1992 = vpack.c.bf16 %v1960, %v1960
  %v1993 = vpack.c.bf16 %v1961, %v1961
  %v1994 = vpack.c.bf16 %v1962, %v1962
  %v1995 = vpack.c.bf16 %v1963, %v1963
  %v1996 = vpack.c.bf16 %v1964, %v1964
  %v1997 = vpack.c.bf16 %v1965, %v1965
  %v1998 = vpack.c.bf16 %v1966, %v1966
  %v1999 = vpack.c.bf16 %v1967, %v1967
  %v2000 = vpack.c.bf16 %v1968, %v1968
  %v2001 = vpack.c.bf16 %v1969, %v1969
  %v2002 = vpack.c.bf16 %v1970, %v1970
  %v2003 = vpack.c.bf16 %v1971, %v1971
  %v2004 = vpack.c.bf16 %v1972, %v1972
  %v2005 = vpack.c.bf16 %v1973, %v1973
  %v2006 = vpack.c.bf16 %v1974, %v1974
  %v2007 = vpack.c.bf16 %v1975, %v1975
  %v2008 = vpack.c.bf16 %v1976, %v1976
  %v2009 = vpack.c.bf16 %v1977, %v1977
  %v2010 = vpack.c.bf16 %v1978, %v1978
  %v2013 = vunpack.c.l.b16 %v1979
  %v2014 = vunpack.c.l.b16 %v1980
  %v2015 = vpack.c.b16 %v2014, %v2013
  %v2019 = vunpack.c.l.b16 %v1981
  %v2020 = vunpack.c.l.b16 %v1982
  %v2021 = vpack.c.b16 %v2020, %v2019
  %v2025 = vunpack.c.l.b16 %v1983
  %v2026 = vunpack.c.l.b16 %v1984
  %v2027 = vpack.c.b16 %v2026, %v2025
  %v2031 = vunpack.c.l.b16 %v1985
  %v2032 = vunpack.c.l.b16 %v1986
  %v2033 = vpack.c.b16 %v2032, %v2031
  %v2037 = vunpack.c.l.b16 %v1987
  %v2038 = vunpack.c.l.b16 %v1988
  %v2039 = vpack.c.b16 %v2038, %v2037
  %v2043 = vunpack.c.l.b16 %v1989
  %v2044 = vunpack.c.l.b16 %v1990
  %v2045 = vpack.c.b16 %v2044, %v2043
  %v2049 = vunpack.c.l.b16 %v1991
  %v2050 = vunpack.c.l.b16 %v1992
  %v2051 = vpack.c.b16 %v2050, %v2049
  %v2055 = vunpack.c.l.b16 %v1993
  %v2056 = vunpack.c.l.b16 %v1994
  %v2057 = vpack.c.b16 %v2056, %v2055
  %v2061 = vunpack.c.l.b16 %v1995
  %v2062 = vunpack.c.l.b16 %v1996
  %v2063 = vpack.c.b16 %v2062, %v2061
  %v2067 = vunpack.c.l.b16 %v1997
  %v2068 = vunpack.c.l.b16 %v1998
  %v2069 = vpack.c.b16 %v2068, %v2067
  %v2073 = vunpack.c.l.b16 %v1999
  %v2074 = vunpack.c.l.b16 %v2000
  %v2075 = vpack.c.b16 %v2074, %v2073
  %v2079 = vunpack.c.l.b16 %v2001
  %v2080 = vunpack.c.l.b16 %v2002
  %v2081 = vpack.c.b16 %v2080, %v2079
  %v2085 = vunpack.c.l.b16 %v2003
  %v2086 = vunpack.c.l.b16 %v2004
  %v2087 = vpack.c.b16 %v2086, %v2085
  %v2091 = vunpack.c.l.b16 %v2005
  %v2092 = vunpack.c.l.b16 %v2006
  %v2093 = vpack.c.b16 %v2092, %v2091
  %v2097 = vunpack.c.l.b16 %v2007
  %v2098 = vunpack.c.l.b16 %v2008
  %v2099 = vpack.c.b16 %v2098, %v2097
  %v2103 = vunpack.c.l.b16 %v2009
  %v2104 = vunpack.c.l.b16 %v2010
  %v2105 = vpack.c.b16 %v2104, %v2103
  %v2107 = vld [vmem:[%s6] sm:$0xf]
  %v2108 = vld [vmem:[%s6 + $0x4] sm:$0xf]
  %v2109 = vld [vmem:[%s6 + $0x8] sm:$0xf]
  %v2110 = vld [vmem:[%s6 + $0xc] sm:$0xf]
  %v2111 = vld [vmem:[%s6 + $0x10] sm:$0xf]
  %v2112 = vld [vmem:[%s6 + $0x14] sm:$0xf]
  %v2113 = vld [vmem:[%s6 + $0x18] sm:$0xf]
  %v2114 = vld [vmem:[%s6 + $0x1c] sm:$0xf]
  %v2115 = vld [vmem:[%s6 + $0x20] sm:$0xf]
  %v2116 = vld [vmem:[%s6 + $0x24] sm:$0xf]
  %v2117 = vld [vmem:[%s6 + $0x28] sm:$0xf]
  %v2118 = vld [vmem:[%s6 + $0x2c] sm:$0xf]
  %v2119 = vld [vmem:[%s6 + $0x30] sm:$0xf]
  %v2120 = vld [vmem:[%s6 + $0x34] sm:$0xf]
  %v2121 = vld [vmem:[%s6 + $0x38] sm:$0xf]
  %v2122 = vld [vmem:[%s6 + $0x3c] sm:$0xf]
  %v2123 = vld [vmem:[%s6 + $0x40] sm:$0xf]
  %v2124 = vld [vmem:[%s6 + $0x44] sm:$0xf]
  %v2125 = vld [vmem:[%s6 + $0x48] sm:$0xf]
  %v2126 = vld [vmem:[%s6 + $0x4c] sm:$0xf]
  %v2127 = vld [vmem:[%s6 + $0x50] sm:$0xf]
  %v2128 = vld [vmem:[%s6 + $0x54] sm:$0xf]
  %v2129 = vld [vmem:[%s6 + $0x58] sm:$0xf]
  %v2130 = vld [vmem:[%s6 + $0x5c] sm:$0xf]
  %v2131 = vld [vmem:[%s6 + $0x60] sm:$0xf]
  %v2132 = vld [vmem:[%s6 + $0x64] sm:$0xf]
  %v2133 = vld [vmem:[%s6 + $0x68] sm:$0xf]
  %v2134 = vld [vmem:[%s6 + $0x6c] sm:$0xf]
  %v2135 = vld [vmem:[%s6 + $0x70] sm:$0xf]
  %v2136 = vld [vmem:[%s6 + $0x74] sm:$0xf]
  %v2137 = vld [vmem:[%s6 + $0x78] sm:$0xf]
  %v2138 = vld [vmem:[%s6 + $0x7c] sm:$0xf]
  %v2139 = vld [vmem:[%s6 + $0x80] sm:$0xf]
  %v2140 = vld [vmem:[%s6 + $0x84] sm:$0xf]
  %v2141 = vld [vmem:[%s6 + $0x88] sm:$0xf]
  %v2142 = vld [vmem:[%s6 + $0x8c] sm:$0xf]
  %v2143 = vld [vmem:[%s6 + $0x90] sm:$0xf]
  %v2144 = vld [vmem:[%s6 + $0x94] sm:$0xf]
  %v2145 = vld [vmem:[%s6 + $0x98] sm:$0xf]
  %v2146 = vld [vmem:[%s6 + $0x9c] sm:$0xf]
  %v2147 = vld [vmem:[%s6 + $0xa0] sm:$0xf]
  %v2148 = vld [vmem:[%s6 + $0xa4] sm:$0xf]
  %v2149 = vld [vmem:[%s6 + $0xa8] sm:$0xf]
  %v2150 = vld [vmem:[%s6 + $0xac] sm:$0xf]
  %v2151 = vld [vmem:[%s6 + $0xb0] sm:$0xf]
  %v2152 = vld [vmem:[%s6 + $0xb4] sm:$0xf]
  %v2153 = vld [vmem:[%s6 + $0xb8] sm:$0xf]
  %v2154 = vld [vmem:[%s6 + $0xbc] sm:$0xf]
  %v2155 = vld [vmem:[%s6 + $0xc0] sm:$0xf]
  %v2156 = vld [vmem:[%s6 + $0xc4] sm:$0xf]
  %v2157 = vld [vmem:[%s6 + $0xc8] sm:$0xf]
  %v2158 = vld [vmem:[%s6 + $0xcc] sm:$0xf]
  %v2159 = vld [vmem:[%s6 + $0xd0] sm:$0xf]
  %v2160 = vld [vmem:[%s6 + $0xd4] sm:$0xf]
  %v2161 = vld [vmem:[%s6 + $0xd8] sm:$0xf]
  %v2162 = vld [vmem:[%s6 + $0xdc] sm:$0xf]
  %v2163 = vld [vmem:[%s6 + $0xe0] sm:$0xf]
  %v2164 = vld [vmem:[%s6 + $0xe4] sm:$0xf]
  %v2165 = vld [vmem:[%s6 + $0xe8] sm:$0xf]
  %v2166 = vld [vmem:[%s6 + $0xec] sm:$0xf]
  %v2167 = vld [vmem:[%s6 + $0xf0] sm:$0xf]
  %v2168 = vld [vmem:[%s6 + $0xf4] sm:$0xf]
  %v2169 = vld [vmem:[%s6 + $0xf8] sm:$0xf]
  %v2170 = vld [vmem:[%s6 + $0xfc] sm:$0xf]
  %v2171 = vld [vmem:[%s6 + $0x100] sm:$0xf]
  %v2172 = vld [vmem:[%s6 + $0x104] sm:$0xf]
  %v2173 = vld [vmem:[%s6 + $0x108] sm:$0xf]
  %v2174 = vld [vmem:[%s6 + $0x10c] sm:$0xf]
  %v2175 = vld [vmem:[%s6 + $0x110] sm:$0xf]
  %v2176 = vld [vmem:[%s6 + $0x114] sm:$0xf]
  %v2177 = vld [vmem:[%s6 + $0x118] sm:$0xf]
  %v2178 = vld [vmem:[%s6 + $0x11c] sm:$0xf]
  %v2179 = vld [vmem:[%s6 + $0x120] sm:$0xf]
  %v2180 = vld [vmem:[%s6 + $0x124] sm:$0xf]
  %v2181 = vld [vmem:[%s6 + $0x128] sm:$0xf]
  %v2182 = vld [vmem:[%s6 + $0x12c] sm:$0xf]
  %v2183 = vld [vmem:[%s6 + $0x130] sm:$0xf]
  %v2184 = vld [vmem:[%s6 + $0x134] sm:$0xf]
  %v2185 = vld [vmem:[%s6 + $0x138] sm:$0xf]
  %v2186 = vld [vmem:[%s6 + $0x13c] sm:$0xf]
  %v2187 = vld [vmem:[%s6 + $0x140] sm:$0xf]
  %v2188 = vld [vmem:[%s6 + $0x144] sm:$0xf]
  %v2189 = vld [vmem:[%s6 + $0x148] sm:$0xf]
  %v2190 = vld [vmem:[%s6 + $0x14c] sm:$0xf]
  %v2191 = vld [vmem:[%s6 + $0x150] sm:$0xf]
  %v2192 = vld [vmem:[%s6 + $0x154] sm:$0xf]
  %v2193 = vld [vmem:[%s6 + $0x158] sm:$0xf]
  %v2194 = vld [vmem:[%s6 + $0x15c] sm:$0xf]
  %v2195 = vld [vmem:[%s6 + $0x160] sm:$0xf]
  %v2196 = vld [vmem:[%s6 + $0x164] sm:$0xf]
  %v2197 = vld [vmem:[%s6 + $0x168] sm:$0xf]
  %v2198 = vld [vmem:[%s6 + $0x16c] sm:$0xf]
  %v2199 = vld [vmem:[%s6 + $0x170] sm:$0xf]
  %v2200 = vld [vmem:[%s6 + $0x174] sm:$0xf]
  %v2201 = vld [vmem:[%s6 + $0x178] sm:$0xf]
  %v2202 = vld [vmem:[%s6 + $0x17c] sm:$0xf]
  %v2203 = vld [vmem:[%s6 + $0x180] sm:$0xf]
  %v2204 = vld [vmem:[%s6 + $0x184] sm:$0xf]
  %v2205 = vld [vmem:[%s6 + $0x188] sm:$0xf]
  %v2206 = vld [vmem:[%s6 + $0x18c] sm:$0xf]
  %v2207 = vld [vmem:[%s6 + $0x190] sm:$0xf]
  %v2208 = vld [vmem:[%s6 + $0x194] sm:$0xf]
  %v2209 = vld [vmem:[%s6 + $0x198] sm:$0xf]
  %v2210 = vld [vmem:[%s6 + $0x19c] sm:$0xf]
  %v2211 = vld [vmem:[%s6 + $0x1a0] sm:$0xf]
  %v2212 = vld [vmem:[%s6 + $0x1a4] sm:$0xf]
  %v2213 = vld [vmem:[%s6 + $0x1a8] sm:$0xf]
  %v2214 = vld [vmem:[%s6 + $0x1ac] sm:$0xf]
  %v2215 = vld [vmem:[%s6 + $0x1b0] sm:$0xf]
  %v2216 = vld [vmem:[%s6 + $0x1b4] sm:$0xf]
  %v2217 = vld [vmem:[%s6 + $0x1b8] sm:$0xf]
  %v2218 = vld [vmem:[%s6 + $0x1bc] sm:$0xf]
  %v2219 = vld [vmem:[%s6 + $0x1c0] sm:$0xf]
  %v2220 = vld [vmem:[%s6 + $0x1c4] sm:$0xf]
  %v2221 = vld [vmem:[%s6 + $0x1c8] sm:$0xf]
  %v2222 = vld [vmem:[%s6 + $0x1cc] sm:$0xf]
  %v2223 = vld [vmem:[%s6 + $0x1d0] sm:$0xf]
  %v2224 = vld [vmem:[%s6 + $0x1d4] sm:$0xf]
  %v2225 = vld [vmem:[%s6 + $0x1d8] sm:$0xf]
  %v2226 = vld [vmem:[%s6 + $0x1dc] sm:$0xf]
  %v2227 = vld [vmem:[%s6 + $0x1e0] sm:$0xf]
  %v2228 = vld [vmem:[%s6 + $0x1e4] sm:$0xf]
  %v2229 = vld [vmem:[%s6 + $0x1e8] sm:$0xf]
  %v2230 = vld [vmem:[%s6 + $0x1ec] sm:$0xf]
  %v2231 = vld [vmem:[%s6 + $0x1f0] sm:$0xf]
  %v2232 = vld [vmem:[%s6 + $0x1f4] sm:$0xf]
  %v2233 = vld [vmem:[%s6 + $0x1f8] sm:$0xf]
  %v2234 = vld [vmem:[%s6 + $0x1fc] sm:$0xf]
  %v2235 = vld [vmem:[%s6 + $0x200] sm:$0xf]
  %v2236 = vld [vmem:[%s6 + $0x204] sm:$0xf]
  %v2237 = vld [vmem:[%s6 + $0x208] sm:$0xf]
  %v2238 = vld [vmem:[%s6 + $0x20c] sm:$0xf]
  %v2239 = vld [vmem:[%s6 + $0x210] sm:$0xf]
  %v2240 = vld [vmem:[%s6 + $0x214] sm:$0xf]
  %v2241 = vld [vmem:[%s6 + $0x218] sm:$0xf]
  %v2242 = vld [vmem:[%s6 + $0x21c] sm:$0xf]
  %v2243 = vld [vmem:[%s6 + $0x220] sm:$0xf]
  %v2244 = vld [vmem:[%s6 + $0x224] sm:$0xf]
  %v2245 = vld [vmem:[%s6 + $0x228] sm:$0xf]
  %v2246 = vld [vmem:[%s6 + $0x22c] sm:$0xf]
  %v2247 = vld [vmem:[%s6 + $0x230] sm:$0xf]
  %v2248 = vld [vmem:[%s6 + $0x234] sm:$0xf]
  %v2249 = vld [vmem:[%s6 + $0x238] sm:$0xf]
  %v2250 = vld [vmem:[%s6 + $0x23c] sm:$0xf]
  %v2251 = vld [vmem:[%s6 + $0x240] sm:$0xf]
  %v2252 = vld [vmem:[%s6 + $0x244] sm:$0xf]
  %v2253 = vld [vmem:[%s6 + $0x248] sm:$0xf]
  %v2254 = vld [vmem:[%s6 + $0x24c] sm:$0xf]
  %v2255 = vld [vmem:[%s6 + $0x250] sm:$0xf]
  %v2256 = vld [vmem:[%s6 + $0x254] sm:$0xf]
  %v2257 = vld [vmem:[%s6 + $0x258] sm:$0xf]
  %v2258 = vld [vmem:[%s6 + $0x25c] sm:$0xf]
  %v2259 = vld [vmem:[%s6 + $0x260] sm:$0xf]
  %v2260 = vld [vmem:[%s6 + $0x264] sm:$0xf]
  %v2261 = vld [vmem:[%s6 + $0x268] sm:$0xf]
  %v2262 = vld [vmem:[%s6 + $0x26c] sm:$0xf]
  %v2263 = vld [vmem:[%s6 + $0x270] sm:$0xf]
  %v2264 = vld [vmem:[%s6 + $0x274] sm:$0xf]
  %v2265 = vld [vmem:[%s6 + $0x278] sm:$0xf]
  %v2266 = vld [vmem:[%s6 + $0x27c] sm:$0xf]
  %v2267 = vld [vmem:[%s6 + $0x280] sm:$0xf]
  %v2268 = vld [vmem:[%s6 + $0x284] sm:$0xf]
  %v2269 = vld [vmem:[%s6 + $0x288] sm:$0xf]
  %v2270 = vld [vmem:[%s6 + $0x28c] sm:$0xf]
  %v2271 = vld [vmem:[%s6 + $0x290] sm:$0xf]
  %v2272 = vld [vmem:[%s6 + $0x294] sm:$0xf]
  %v2273 = vld [vmem:[%s6 + $0x298] sm:$0xf]
  %v2274 = vld [vmem:[%s6 + $0x29c] sm:$0xf]
  %v2275 = vld [vmem:[%s6 + $0x2a0] sm:$0xf]
  %v2276 = vld [vmem:[%s6 + $0x2a4] sm:$0xf]
  %v2277 = vld [vmem:[%s6 + $0x2a8] sm:$0xf]
  %v2278 = vld [vmem:[%s6 + $0x2ac] sm:$0xf]
  %v2279 = vld [vmem:[%s6 + $0x2b0] sm:$0xf]
  %v2280 = vld [vmem:[%s6 + $0x2b4] sm:$0xf]
  %v2281 = vld [vmem:[%s6 + $0x2b8] sm:$0xf]
  %v2282 = vld [vmem:[%s6 + $0x2bc] sm:$0xf]
  %v2283 = vld [vmem:[%s6 + $0x2c0] sm:$0xf]
  %v2284 = vld [vmem:[%s6 + $0x2c4] sm:$0xf]
  %v2285 = vld [vmem:[%s6 + $0x2c8] sm:$0xf]
  %v2286 = vld [vmem:[%s6 + $0x2cc] sm:$0xf]
  %v2287 = vld [vmem:[%s6 + $0x2d0] sm:$0xf]
  %v2288 = vld [vmem:[%s6 + $0x2d4] sm:$0xf]
  %v2289 = vld [vmem:[%s6 + $0x2d8] sm:$0xf]
  %v2290 = vld [vmem:[%s6 + $0x2dc] sm:$0xf]
  %v2291 = vld [vmem:[%s6 + $0x2e0] sm:$0xf]
  %v2292 = vld [vmem:[%s6 + $0x2e4] sm:$0xf]
  %v2293 = vld [vmem:[%s6 + $0x2e8] sm:$0xf]
  %v2294 = vld [vmem:[%s6 + $0x2ec] sm:$0xf]
  %v2295 = vld [vmem:[%s6 + $0x2f0] sm:$0xf]
  %v2296 = vld [vmem:[%s6 + $0x2f4] sm:$0xf]
  %v2297 = vld [vmem:[%s6 + $0x2f8] sm:$0xf]
  %v2298 = vld [vmem:[%s6 + $0x2fc] sm:$0xf]
  %v2299 = vld [vmem:[%s6 + $0x300] sm:$0xf]
  %v2300 = vld [vmem:[%s6 + $0x304] sm:$0xf]
  %v2301 = vld [vmem:[%s6 + $0x308] sm:$0xf]
  %v2302 = vld [vmem:[%s6 + $0x30c] sm:$0xf]
  %v2303 = vld [vmem:[%s6 + $0x310] sm:$0xf]
  %v2304 = vld [vmem:[%s6 + $0x314] sm:$0xf]
  %v2305 = vld [vmem:[%s6 + $0x318] sm:$0xf]
  %v2306 = vld [vmem:[%s6 + $0x31c] sm:$0xf]
  %v2307 = vld [vmem:[%s6 + $0x320] sm:$0xf]
  %v2308 = vld [vmem:[%s6 + $0x324] sm:$0xf]
  %v2309 = vld [vmem:[%s6 + $0x328] sm:$0xf]
  %v2310 = vld [vmem:[%s6 + $0x32c] sm:$0xf]
  %v2311 = vld [vmem:[%s6 + $0x330] sm:$0xf]
  %v2312 = vld [vmem:[%s6 + $0x334] sm:$0xf]
  %v2313 = vld [vmem:[%s6 + $0x338] sm:$0xf]
  %v2314 = vld [vmem:[%s6 + $0x33c] sm:$0xf]
  %v2315 = vld [vmem:[%s6 + $0x340] sm:$0xf]
  %v2316 = vld [vmem:[%s6 + $0x344] sm:$0xf]
  %v2317 = vld [vmem:[%s6 + $0x348] sm:$0xf]
  %v2318 = vld [vmem:[%s6 + $0x34c] sm:$0xf]
  %v2319 = vld [vmem:[%s6 + $0x350] sm:$0xf]
  %v2320 = vld [vmem:[%s6 + $0x354] sm:$0xf]
  %v2321 = vld [vmem:[%s6 + $0x358] sm:$0xf]
  %v2322 = vld [vmem:[%s6 + $0x35c] sm:$0xf]
  %v2323 = vld [vmem:[%s6 + $0x360] sm:$0xf]
  %v2324 = vld [vmem:[%s6 + $0x364] sm:$0xf]
  %v2325 = vld [vmem:[%s6 + $0x368] sm:$0xf]
  %v2326 = vld [vmem:[%s6 + $0x36c] sm:$0xf]
  %v2327 = vld [vmem:[%s6 + $0x370] sm:$0xf]
  %v2328 = vld [vmem:[%s6 + $0x374] sm:$0xf]
  %v2329 = vld [vmem:[%s6 + $0x378] sm:$0xf]
  %v2330 = vld [vmem:[%s6 + $0x37c] sm:$0xf]
  %v2331 = vld [vmem:[%s6 + $0x380] sm:$0xf]
  %v2332 = vld [vmem:[%s6 + $0x384] sm:$0xf]
  %v2333 = vld [vmem:[%s6 + $0x388] sm:$0xf]
  %v2334 = vld [vmem:[%s6 + $0x38c] sm:$0xf]
  %v2335 = vld [vmem:[%s6 + $0x390] sm:$0xf]
  %v2336 = vld [vmem:[%s6 + $0x394] sm:$0xf]
  %v2337 = vld [vmem:[%s6 + $0x398] sm:$0xf]
  %v2338 = vld [vmem:[%s6 + $0x39c] sm:$0xf]
  %v2339 = vld [vmem:[%s6 + $0x3a0] sm:$0xf]
  %v2340 = vld [vmem:[%s6 + $0x3a4] sm:$0xf]
  %v2341 = vld [vmem:[%s6 + $0x3a8] sm:$0xf]
  %v2342 = vld [vmem:[%s6 + $0x3ac] sm:$0xf]
  %v2343 = vld [vmem:[%s6 + $0x3b0] sm:$0xf]
  %v2344 = vld [vmem:[%s6 + $0x3b4] sm:$0xf]
  %v2345 = vld [vmem:[%s6 + $0x3b8] sm:$0xf]
  %v2346 = vld [vmem:[%s6 + $0x3bc] sm:$0xf]
  %v2347 = vld [vmem:[%s6 + $0x3c0] sm:$0xf]
  %v2348 = vld [vmem:[%s6 + $0x3c4] sm:$0xf]
  %v2349 = vld [vmem:[%s6 + $0x3c8] sm:$0xf]
  %v2350 = vld [vmem:[%s6 + $0x3cc] sm:$0xf]
  %v2351 = vld [vmem:[%s6 + $0x3d0] sm:$0xf]
  %v2352 = vld [vmem:[%s6 + $0x3d4] sm:$0xf]
  %v2353 = vld [vmem:[%s6 + $0x3d8] sm:$0xf]
  %v2354 = vld [vmem:[%s6 + $0x3dc] sm:$0xf]
  %v2355 = vld [vmem:[%s6 + $0x3e0] sm:$0xf]
  %v2356 = vld [vmem:[%s6 + $0x3e4] sm:$0xf]
  %v2357 = vld [vmem:[%s6 + $0x3e8] sm:$0xf]
  %v2358 = vld [vmem:[%s6 + $0x3ec] sm:$0xf]
  %v2359 = vld [vmem:[%s6 + $0x3f0] sm:$0xf]
  %v2360 = vld [vmem:[%s6 + $0x3f4] sm:$0xf]
  %v2361 = vld [vmem:[%s6 + $0x3f8] sm:$0xf]
  %v2362 = vld [vmem:[%s6 + $0x3fc] sm:$0xf]
  %v2363 = vld [vmem:[%s7] sm:$0x1]
  %v2365 = vperm.slane %v2363, 0
  %v2623 = vunpack.c.l.b16 %v2107
  %v2624 = vunpack.c.l.b16 %v2108
  %v2625 = vunpack.c.l.b16 %v2109
  %v2626 = vunpack.c.l.b16 %v2110
  %v2627 = vunpack.c.l.b16 %v2111
  %v2628 = vunpack.c.l.b16 %v2112
  %v2629 = vunpack.c.l.b16 %v2113
  %v2630 = vunpack.c.l.b16 %v2114
  %v2631 = vunpack.c.l.b16 %v2115
  %v2632 = vunpack.c.l.b16 %v2116
  %v2633 = vunpack.c.l.b16 %v2117
  %v2634 = vunpack.c.l.b16 %v2118
  %v2635 = vunpack.c.l.b16 %v2119
  %v2636 = vunpack.c.l.b16 %v2120
  %v2637 = vunpack.c.l.b16 %v2121
  %v2638 = vunpack.c.l.b16 %v2122
  %v2639 = vunpack.c.l.b16 %v2123
  %v2640 = vunpack.c.l.b16 %v2124
  %v2641 = vunpack.c.l.b16 %v2125
  %v2642 = vunpack.c.l.b16 %v2126
  %v2643 = vunpack.c.l.b16 %v2127
  %v2644 = vunpack.c.l.b16 %v2128
  %v2645 = vunpack.c.l.b16 %v2129
  %v2646 = vunpack.c.l.b16 %v2130
  %v2647 = vunpack.c.l.b16 %v2131
  %v2648 = vunpack.c.l.b16 %v2132
  %v2649 = vunpack.c.l.b16 %v2133
  %v2650 = vunpack.c.l.b16 %v2134
  %v2651 = vunpack.c.l.b16 %v2135
  %v2652 = vunpack.c.l.b16 %v2136
  %v2653 = vunpack.c.l.b16 %v2137
  %v2654 = vunpack.c.l.b16 %v2138
  %v2655 = vunpack.c.l.b16 %v2139
  %v2656 = vunpack.c.l.b16 %v2140
  %v2657 = vunpack.c.l.b16 %v2141
  %v2658 = vunpack.c.l.b16 %v2142
  %v2659 = vunpack.c.l.b16 %v2143
  %v2660 = vunpack.c.l.b16 %v2144
  %v2661 = vunpack.c.l.b16 %v2145
  %v2662 = vunpack.c.l.b16 %v2146
  %v2663 = vunpack.c.l.b16 %v2147
  %v2664 = vunpack.c.l.b16 %v2148
  %v2665 = vunpack.c.l.b16 %v2149
  %v2666 = vunpack.c.l.b16 %v2150
  %v2667 = vunpack.c.l.b16 %v2151
  %v2668 = vunpack.c.l.b16 %v2152
  %v2669 = vunpack.c.l.b16 %v2153
  %v2670 = vunpack.c.l.b16 %v2154
  %v2671 = vunpack.c.l.b16 %v2155
  %v2672 = vunpack.c.l.b16 %v2156
  %v2673 = vunpack.c.l.b16 %v2157
  %v2674 = vunpack.c.l.b16 %v2158
  %v2675 = vunpack.c.l.b16 %v2159
  %v2676 = vunpack.c.l.b16 %v2160
  %v2677 = vunpack.c.l.b16 %v2161
  %v2678 = vunpack.c.l.b16 %v2162
  %v2679 = vunpack.c.l.b16 %v2163
  %v2680 = vunpack.c.l.b16 %v2164
  %v2681 = vunpack.c.l.b16 %v2165
  %v2682 = vunpack.c.l.b16 %v2166
  %v2683 = vunpack.c.l.b16 %v2167
  %v2684 = vunpack.c.l.b16 %v2168
  %v2685 = vunpack.c.l.b16 %v2169
  %v2686 = vunpack.c.l.b16 %v2170
  %v2687 = vunpack.c.l.b16 %v2171
  %v2688 = vunpack.c.l.b16 %v2172
  %v2689 = vunpack.c.l.b16 %v2173
  %v2690 = vunpack.c.l.b16 %v2174
  %v2691 = vunpack.c.l.b16 %v2175
  %v2692 = vunpack.c.l.b16 %v2176
  %v2693 = vunpack.c.l.b16 %v2177
  %v2694 = vunpack.c.l.b16 %v2178
  %v2695 = vunpack.c.l.b16 %v2179
  %v2696 = vunpack.c.l.b16 %v2180
  %v2697 = vunpack.c.l.b16 %v2181
  %v2698 = vunpack.c.l.b16 %v2182
  %v2699 = vunpack.c.l.b16 %v2183
  %v2700 = vunpack.c.l.b16 %v2184
  %v2701 = vunpack.c.l.b16 %v2185
  %v2702 = vunpack.c.l.b16 %v2186
  %v2703 = vunpack.c.l.b16 %v2187
  %v2704 = vunpack.c.l.b16 %v2188
  %v2705 = vunpack.c.l.b16 %v2189
  %v2706 = vunpack.c.l.b16 %v2190
  %v2707 = vunpack.c.l.b16 %v2191
  %v2708 = vunpack.c.l.b16 %v2192
  %v2709 = vunpack.c.l.b16 %v2193
  %v2710 = vunpack.c.l.b16 %v2194
  %v2711 = vunpack.c.l.b16 %v2195
  %v2712 = vunpack.c.l.b16 %v2196
  %v2713 = vunpack.c.l.b16 %v2197
  %v2714 = vunpack.c.l.b16 %v2198
  %v2715 = vunpack.c.l.b16 %v2199
  %v2716 = vunpack.c.l.b16 %v2200
  %v2717 = vunpack.c.l.b16 %v2201
  %v2718 = vunpack.c.l.b16 %v2202
  %v2719 = vunpack.c.l.b16 %v2203
  %v2720 = vunpack.c.l.b16 %v2204
  %v2721 = vunpack.c.l.b16 %v2205
  %v2722 = vunpack.c.l.b16 %v2206
  %v2723 = vunpack.c.l.b16 %v2207
  %v2724 = vunpack.c.l.b16 %v2208
  %v2725 = vunpack.c.l.b16 %v2209
  %v2726 = vunpack.c.l.b16 %v2210
  %v2727 = vunpack.c.l.b16 %v2211
  %v2728 = vunpack.c.l.b16 %v2212
  %v2729 = vunpack.c.l.b16 %v2213
  %v2730 = vunpack.c.l.b16 %v2214
  %v2731 = vunpack.c.l.b16 %v2215
  %v2732 = vunpack.c.l.b16 %v2216
  %v2733 = vunpack.c.l.b16 %v2217
  %v2734 = vunpack.c.l.b16 %v2218
  %v2735 = vunpack.c.l.b16 %v2219
  %v2736 = vunpack.c.l.b16 %v2220
  %v2737 = vunpack.c.l.b16 %v2221
  %v2738 = vunpack.c.l.b16 %v2222
  %v2739 = vunpack.c.l.b16 %v2223
  %v2740 = vunpack.c.l.b16 %v2224
  %v2741 = vunpack.c.l.b16 %v2225
  %v2742 = vunpack.c.l.b16 %v2226
  %v2743 = vunpack.c.l.b16 %v2227
  %v2744 = vunpack.c.l.b16 %v2228
  %v2745 = vunpack.c.l.b16 %v2229
  %v2746 = vunpack.c.l.b16 %v2230
  %v2747 = vunpack.c.l.b16 %v2231
  %v2748 = vunpack.c.l.b16 %v2232
  %v2749 = vunpack.c.l.b16 %v2233
  %v2750 = vunpack.c.l.b16 %v2234
  %v2751 = vunpack.c.l.b16 %v2235
  %v2752 = vunpack.c.l.b16 %v2236
  %v2753 = vunpack.c.l.b16 %v2237
  %v2754 = vunpack.c.l.b16 %v2238
  %v2755 = vunpack.c.l.b16 %v2239
  %v2756 = vunpack.c.l.b16 %v2240
  %v2757 = vunpack.c.l.b16 %v2241
  %v2758 = vunpack.c.l.b16 %v2242
  %v2759 = vunpack.c.l.b16 %v2243
  %v2760 = vunpack.c.l.b16 %v2244
  %v2761 = vunpack.c.l.b16 %v2245
  %v2762 = vunpack.c.l.b16 %v2246
  %v2763 = vunpack.c.l.b16 %v2247
  %v2764 = vunpack.c.l.b16 %v2248
  %v2765 = vunpack.c.l.b16 %v2249
  %v2766 = vunpack.c.l.b16 %v2250
  %v2767 = vunpack.c.l.b16 %v2251
  %v2768 = vunpack.c.l.b16 %v2252
  %v2769 = vunpack.c.l.b16 %v2253
  %v2770 = vunpack.c.l.b16 %v2254
  %v2771 = vunpack.c.l.b16 %v2255
  %v2772 = vunpack.c.l.b16 %v2256
  %v2773 = vunpack.c.l.b16 %v2257
  %v2774 = vunpack.c.l.b16 %v2258
  %v2775 = vunpack.c.l.b16 %v2259
  %v2776 = vunpack.c.l.b16 %v2260
  %v2777 = vunpack.c.l.b16 %v2261
  %v2778 = vunpack.c.l.b16 %v2262
  %v2779 = vunpack.c.l.b16 %v2263
  %v2780 = vunpack.c.l.b16 %v2264
  %v2781 = vunpack.c.l.b16 %v2265
  %v2782 = vunpack.c.l.b16 %v2266
  %v2783 = vunpack.c.l.b16 %v2267
  %v2784 = vunpack.c.l.b16 %v2268
  %v2785 = vunpack.c.l.b16 %v2269
  %v2786 = vunpack.c.l.b16 %v2270
  %v2787 = vunpack.c.l.b16 %v2271
  %v2788 = vunpack.c.l.b16 %v2272
  %v2789 = vunpack.c.l.b16 %v2273
  %v2790 = vunpack.c.l.b16 %v2274
  %v2791 = vunpack.c.l.b16 %v2275
  %v2792 = vunpack.c.l.b16 %v2276
  %v2793 = vunpack.c.l.b16 %v2277
  %v2794 = vunpack.c.l.b16 %v2278
  %v2795 = vunpack.c.l.b16 %v2279
  %v2796 = vunpack.c.l.b16 %v2280
  %v2797 = vunpack.c.l.b16 %v2281
  %v2798 = vunpack.c.l.b16 %v2282
  %v2799 = vunpack.c.l.b16 %v2283
  %v2800 = vunpack.c.l.b16 %v2284
  %v2801 = vunpack.c.l.b16 %v2285
  %v2802 = vunpack.c.l.b16 %v2286
  %v2803 = vunpack.c.l.b16 %v2287
  %v2804 = vunpack.c.l.b16 %v2288
  %v2805 = vunpack.c.l.b16 %v2289
  %v2806 = vunpack.c.l.b16 %v2290
  %v2807 = vunpack.c.l.b16 %v2291
  %v2808 = vunpack.c.l.b16 %v2292
  %v2809 = vunpack.c.l.b16 %v2293
  %v2810 = vunpack.c.l.b16 %v2294
  %v2811 = vunpack.c.l.b16 %v2295
  %v2812 = vunpack.c.l.b16 %v2296
  %v2813 = vunpack.c.l.b16 %v2297
  %v2814 = vunpack.c.l.b16 %v2298
  %v2815 = vunpack.c.l.b16 %v2299
  %v2816 = vunpack.c.l.b16 %v2300
  %v2817 = vunpack.c.l.b16 %v2301
  %v2818 = vunpack.c.l.b16 %v2302
  %v2819 = vunpack.c.l.b16 %v2303
  %v2820 = vunpack.c.l.b16 %v2304
  %v2821 = vunpack.c.l.b16 %v2305
  %v2822 = vunpack.c.l.b16 %v2306
  %v2823 = vunpack.c.l.b16 %v2307
  %v2824 = vunpack.c.l.b16 %v2308
  %v2825 = vunpack.c.l.b16 %v2309
  %v2826 = vunpack.c.l.b16 %v2310
  %v2827 = vunpack.c.l.b16 %v2311
  %v2828 = vunpack.c.l.b16 %v2312
  %v2829 = vunpack.c.l.b16 %v2313
  %v2830 = vunpack.c.l.b16 %v2314
  %v2831 = vunpack.c.l.b16 %v2315
  %v2832 = vunpack.c.l.b16 %v2316
  %v2833 = vunpack.c.l.b16 %v2317
  %v2834 = vunpack.c.l.b16 %v2318
  %v2835 = vunpack.c.l.b16 %v2319
  %v2836 = vunpack.c.l.b16 %v2320
  %v2837 = vunpack.c.l.b16 %v2321
  %v2838 = vunpack.c.l.b16 %v2322
  %v2839 = vunpack.c.l.b16 %v2323
  %v2840 = vunpack.c.l.b16 %v2324
  %v2841 = vunpack.c.l.b16 %v2325
  %v2842 = vunpack.c.l.b16 %v2326
  %v2843 = vunpack.c.l.b16 %v2327
  %v2844 = vunpack.c.l.b16 %v2328
  %v2845 = vunpack.c.l.b16 %v2329
  %v2846 = vunpack.c.l.b16 %v2330
  %v2847 = vunpack.c.l.b16 %v2331
  %v2848 = vunpack.c.l.b16 %v2332
  %v2849 = vunpack.c.l.b16 %v2333
  %v2850 = vunpack.c.l.b16 %v2334
  %v2851 = vunpack.c.l.b16 %v2335
  %v2852 = vunpack.c.l.b16 %v2336
  %v2853 = vunpack.c.l.b16 %v2337
  %v2854 = vunpack.c.l.b16 %v2338
  %v2855 = vunpack.c.l.b16 %v2339
  %v2856 = vunpack.c.l.b16 %v2340
  %v2857 = vunpack.c.l.b16 %v2341
  %v2858 = vunpack.c.l.b16 %v2342
  %v2859 = vunpack.c.l.b16 %v2343
  %v2860 = vunpack.c.l.b16 %v2344
  %v2861 = vunpack.c.l.b16 %v2345
  %v2862 = vunpack.c.l.b16 %v2346
  %v2863 = vunpack.c.l.b16 %v2347
  %v2864 = vunpack.c.l.b16 %v2348
  %v2865 = vunpack.c.l.b16 %v2349
  %v2866 = vunpack.c.l.b16 %v2350
  %v2867 = vunpack.c.l.b16 %v2351
  %v2868 = vunpack.c.l.b16 %v2352
  %v2869 = vunpack.c.l.b16 %v2353
  %v2870 = vunpack.c.l.b16 %v2354
  %v2871 = vunpack.c.l.b16 %v2355
  %v2872 = vunpack.c.l.b16 %v2356
  %v2873 = vunpack.c.l.b16 %v2357
  %v2874 = vunpack.c.l.b16 %v2358
  %v2875 = vunpack.c.l.b16 %v2359
  %v2876 = vunpack.c.l.b16 %v2360
  %v2877 = vunpack.c.l.b16 %v2361
  %v2878 = vunpack.c.l.b16 %v2362
  %v2879 = vpack.c.b16 %v2624, %v2623
  %v2880 = vpack.c.b16 %v2626, %v2625
  %v2881 = vpack.c.b16 %v2628, %v2627
  %v2882 = vpack.c.b16 %v2630, %v2629
  %v2883 = vpack.c.b16 %v2632, %v2631
  %v2884 = vpack.c.b16 %v2634, %v2633
  %v2885 = vpack.c.b16 %v2636, %v2635
  %v2886 = vpack.c.b16 %v2638, %v2637
  %v2887 = vpack.c.b16 %v2640, %v2639
  %v2888 = vpack.c.b16 %v2642, %v2641
  %v2889 = vpack.c.b16 %v2644, %v2643
  %v2890 = vpack.c.b16 %v2646, %v2645
  %v2891 = vpack.c.b16 %v2648, %v2647
  %v2892 = vpack.c.b16 %v2650, %v2649
  %v2893 = vpack.c.b16 %v2652, %v2651
  %v2894 = vpack.c.b16 %v2654, %v2653
  %v2895 = vpack.c.b16 %v2656, %v2655
  %v2896 = vpack.c.b16 %v2658, %v2657
  %v2897 = vpack.c.b16 %v2660, %v2659
  %v2898 = vpack.c.b16 %v2662, %v2661
  %v2899 = vpack.c.b16 %v2664, %v2663
  %v2900 = vpack.c.b16 %v2666, %v2665
  %v2901 = vpack.c.b16 %v2668, %v2667
  %v2902 = vpack.c.b16 %v2670, %v2669
  %v2903 = vpack.c.b16 %v2672, %v2671
  %v2904 = vpack.c.b16 %v2674, %v2673
  %v2905 = vpack.c.b16 %v2676, %v2675
  %v2906 = vpack.c.b16 %v2678, %v2677
  %v2907 = vpack.c.b16 %v2680, %v2679
  %v2908 = vpack.c.b16 %v2682, %v2681
  %v2909 = vpack.c.b16 %v2684, %v2683
  %v2910 = vpack.c.b16 %v2686, %v2685
  %v2911 = vpack.c.b16 %v2688, %v2687
  %v2912 = vpack.c.b16 %v2690, %v2689
  %v2913 = vpack.c.b16 %v2692, %v2691
  %v2914 = vpack.c.b16 %v2694, %v2693
  %v2915 = vpack.c.b16 %v2696, %v2695
  %v2916 = vpack.c.b16 %v2698, %v2697
  %v2917 = vpack.c.b16 %v2700, %v2699
  %v2918 = vpack.c.b16 %v2702, %v2701
  %v2919 = vpack.c.b16 %v2704, %v2703
  %v2920 = vpack.c.b16 %v2706, %v2705
  %v2921 = vpack.c.b16 %v2708, %v2707
  %v2922 = vpack.c.b16 %v2710, %v2709
  %v2923 = vpack.c.b16 %v2712, %v2711
  %v2924 = vpack.c.b16 %v2714, %v2713
  %v2925 = vpack.c.b16 %v2716, %v2715
  %v2926 = vpack.c.b16 %v2718, %v2717
  %v2927 = vpack.c.b16 %v2720, %v2719
  %v2928 = vpack.c.b16 %v2722, %v2721
  %v2929 = vpack.c.b16 %v2724, %v2723
  %v2930 = vpack.c.b16 %v2726, %v2725
  %v2931 = vpack.c.b16 %v2728, %v2727
  %v2932 = vpack.c.b16 %v2730, %v2729
  %v2933 = vpack.c.b16 %v2732, %v2731
  %v2934 = vpack.c.b16 %v2734, %v2733
  %v2935 = vpack.c.b16 %v2736, %v2735
  %v2936 = vpack.c.b16 %v2738, %v2737
  %v2937 = vpack.c.b16 %v2740, %v2739
  %v2938 = vpack.c.b16 %v2742, %v2741
  %v2939 = vpack.c.b16 %v2744, %v2743
  %v2940 = vpack.c.b16 %v2746, %v2745
  %v2941 = vpack.c.b16 %v2748, %v2747
  %v2942 = vpack.c.b16 %v2750, %v2749
  %v2943 = vpack.c.b16 %v2752, %v2751
  %v2944 = vpack.c.b16 %v2754, %v2753
  %v2945 = vpack.c.b16 %v2756, %v2755
  %v2946 = vpack.c.b16 %v2758, %v2757
  %v2947 = vpack.c.b16 %v2760, %v2759
  %v2948 = vpack.c.b16 %v2762, %v2761
  %v2949 = vpack.c.b16 %v2764, %v2763
  %v2950 = vpack.c.b16 %v2766, %v2765
  %v2951 = vpack.c.b16 %v2768, %v2767
  %v2952 = vpack.c.b16 %v2770, %v2769
  %v2953 = vpack.c.b16 %v2772, %v2771
  %v2954 = vpack.c.b16 %v2774, %v2773
  %v2955 = vpack.c.b16 %v2776, %v2775
  %v2956 = vpack.c.b16 %v2778, %v2777
  %v2957 = vpack.c.b16 %v2780, %v2779
  %v2958 = vpack.c.b16 %v2782, %v2781
  %v2959 = vpack.c.b16 %v2784, %v2783
  %v2960 = vpack.c.b16 %v2786, %v2785
  %v2961 = vpack.c.b16 %v2788, %v2787
  %v2962 = vpack.c.b16 %v2790, %v2789
  %v2963 = vpack.c.b16 %v2792, %v2791
  %v2964 = vpack.c.b16 %v2794, %v2793
  %v2965 = vpack.c.b16 %v2796, %v2795
  %v2966 = vpack.c.b16 %v2798, %v2797
  %v2967 = vpack.c.b16 %v2800, %v2799
  %v2968 = vpack.c.b16 %v2802, %v2801
  %v2969 = vpack.c.b16 %v2804, %v2803
  %v2970 = vpack.c.b16 %v2806, %v2805
  %v2971 = vpack.c.b16 %v2808, %v2807
  %v2972 = vpack.c.b16 %v2810, %v2809
  %v2973 = vpack.c.b16 %v2812, %v2811
  %v2974 = vpack.c.b16 %v2814, %v2813
  %v2975 = vpack.c.b16 %v2816, %v2815
  %v2976 = vpack.c.b16 %v2818, %v2817
  %v2977 = vpack.c.b16 %v2820, %v2819
  %v2978 = vpack.c.b16 %v2822, %v2821
  %v2979 = vpack.c.b16 %v2824, %v2823
  %v2980 = vpack.c.b16 %v2826, %v2825
  %v2981 = vpack.c.b16 %v2828, %v2827
  %v2982 = vpack.c.b16 %v2830, %v2829
  %v2983 = vpack.c.b16 %v2832, %v2831
  %v2984 = vpack.c.b16 %v2834, %v2833
  %v2985 = vpack.c.b16 %v2836, %v2835
  %v2986 = vpack.c.b16 %v2838, %v2837
  %v2987 = vpack.c.b16 %v2840, %v2839
  %v2988 = vpack.c.b16 %v2842, %v2841
  %v2989 = vpack.c.b16 %v2844, %v2843
  %v2990 = vpack.c.b16 %v2846, %v2845
  %v2991 = vpack.c.b16 %v2848, %v2847
  %v2992 = vpack.c.b16 %v2850, %v2849
  %v2993 = vpack.c.b16 %v2852, %v2851
  %v2994 = vpack.c.b16 %v2854, %v2853
  %v2995 = vpack.c.b16 %v2856, %v2855
  %v2996 = vpack.c.b16 %v2858, %v2857
  %v2997 = vpack.c.b16 %v2860, %v2859
  %v2998 = vpack.c.b16 %v2862, %v2861
  %v2999 = vpack.c.b16 %v2864, %v2863
  %v3000 = vpack.c.b16 %v2866, %v2865
  %v3001 = vpack.c.b16 %v2868, %v2867
  %v3002 = vpack.c.b16 %v2870, %v2869
  %v3003 = vpack.c.b16 %v2872, %v2871
  %v3004 = vpack.c.b16 %v2874, %v2873
  %v3005 = vpack.c.b16 %v2876, %v2875
  %v3006 = vpack.c.b16 %v2878, %v2877
  %3135 = vmatpush.bf16.msra.mxu0 %v2886
  %3136 = vmatpush.bf16.msra.mxu0 %v2885
  %3137 = vmatpush.bf16.msra.mxu0 %v2884
  %3138 = vmatpush.bf16.msra.mxu0 %v2883
  %3139 = vmatpush.bf16.msra.mxu0 %v2882
  %3140 = vmatpush.bf16.msra.mxu0 %v2881
  %3141 = vmatpush.bf16.msra.mxu0 %v2880
  %3142 = vmatpush.bf16.msra.mxu0 %v2879
  %3143 = vmatmul.bf16.gmra.mxu0 %v2015
  %v3144 = vpop.f32.mrf.mxu0
  %v3145 = vadd.f32 %v2365, %v3144
  %v3146 = vpop.f32.mrf.mxu0
  %v3147 = vadd.f32 %v2365, %v3146
  %3148 = vdwg.mxu0
  %3149 = vmatpush.bf16.msra.mxu0 %v2894
  %3150 = vmatpush.bf16.msra.mxu0 %v2893
  %3151 = vmatpush.bf16.msra.mxu0 %v2892
  %3152 = vmatpush.bf16.msra.mxu0 %v2891
  %3153 = vmatpush.bf16.msra.mxu0 %v2890
  %3154 = vmatpush.bf16.msra.mxu0 %v2889
  %3155 = vmatpush.bf16.msra.mxu0 %v2888
  %3156 = vmatpush.bf16.msra.mxu0 %v2887
  %3157 = vmatmul.bf16.gmra.mxu0 %v2021
  %v3158 = vpop.f32.mrf.mxu0
  %v3159 = vadd.f32 %v3145, %v3158
  %v3160 = vpop.f32.mrf.mxu0
  %v3161 = vadd.f32 %v3147, %v3160
  %3162 = vdwg.mxu0
  %3163 = vmatpush.bf16.msra.mxu0 %v2902
  %3164 = vmatpush.bf16.msra.mxu0 %v2901
  %3165 = vmatpush.bf16.msra.mxu0 %v2900
  %3166 = vmatpush.bf16.msra.mxu0 %v2899
  %3167 = vmatpush.bf16.msra.mxu0 %v2898
  %3168 = vmatpush.bf16.msra.mxu0 %v2897
  %3169 = vmatpush.bf16.msra.mxu0 %v2896
  %3170 = vmatpush.bf16.msra.mxu0 %v2895
  %3171 = vmatmul.bf16.gmra.mxu0 %v2027
  %v3172 = vpop.f32.mrf.mxu0
  %v3173 = vadd.f32 %v3159, %v3172
  %v3174 = vpop.f32.mrf.mxu0
  %v3175 = vadd.f32 %v3161, %v3174
  %3176 = vdwg.mxu0
  %3177 = vmatpush.bf16.msra.mxu0 %v2910
  %3178 = vmatpush.bf16.msra.mxu0 %v2909
  %3179 = vmatpush.bf16.msra.mxu0 %v2908
  %3180 = vmatpush.bf16.msra.mxu0 %v2907
  %3181 = vmatpush.bf16.msra.mxu0 %v2906
  %3182 = vmatpush.bf16.msra.mxu0 %v2905
  %3183 = vmatpush.bf16.msra.mxu0 %v2904
  %3184 = vmatpush.bf16.msra.mxu0 %v2903
  %3185 = vmatmul.bf16.gmra.mxu0 %v2033
  %v3186 = vpop.f32.mrf.mxu0
  %v3187 = vadd.f32 %v3173, %v3186
  %v3188 = vpop.f32.mrf.mxu0
  %v3189 = vadd.f32 %v3175, %v3188
  %3190 = vdwg.mxu0
  %3191 = vmatpush.bf16.msra.mxu0 %v2918
  %3192 = vmatpush.bf16.msra.mxu0 %v2917
  %3193 = vmatpush.bf16.msra.mxu0 %v2916
  %3194 = vmatpush.bf16.msra.mxu0 %v2915
  %3195 = vmatpush.bf16.msra.mxu0 %v2914
  %3196 = vmatpush.bf16.msra.mxu0 %v2913
  %3197 = vmatpush.bf16.msra.mxu0 %v2912
  %3198 = vmatpush.bf16.msra.mxu0 %v2911
  %3199 = vmatmul.bf16.gmra.mxu0 %v2039
  %v3200 = vpop.f32.mrf.mxu0
  %v3201 = vadd.f32 %v3187, %v3200
  %v3202 = vpop.f32.mrf.mxu0
  %v3203 = vadd.f32 %v3189, %v3202
  %3204 = vdwg.mxu0
  %3205 = vmatpush.bf16.msra.mxu0 %v2926
  %3206 = vmatpush.bf16.msra.mxu0 %v2925
  %3207 = vmatpush.bf16.msra.mxu0 %v2924
  %3208 = vmatpush.bf16.msra.mxu0 %v2923
  %3209 = vmatpush.bf16.msra.mxu0 %v2922
  %3210 = vmatpush.bf16.msra.mxu0 %v2921
  %3211 = vmatpush.bf16.msra.mxu0 %v2920
  %3212 = vmatpush.bf16.msra.mxu0 %v2919
  %3213 = vmatmul.bf16.gmra.mxu0 %v2045
  %v3214 = vpop.f32.mrf.mxu0
  %v3215 = vadd.f32 %v3201, %v3214
  %v3216 = vpop.f32.mrf.mxu0
  %v3217 = vadd.f32 %v3203, %v3216
  %3218 = vdwg.mxu0
  %3219 = vmatpush.bf16.msra.mxu0 %v2934
  %3220 = vmatpush.bf16.msra.mxu0 %v2933
  %3221 = vmatpush.bf16.msra.mxu0 %v2932
  %3222 = vmatpush.bf16.msra.mxu0 %v2931
  %3223 = vmatpush.bf16.msra.mxu0 %v2930
  %3224 = vmatpush.bf16.msra.mxu0 %v2929
  %3225 = vmatpush.bf16.msra.mxu0 %v2928
  %3226 = vmatpush.bf16.msra.mxu0 %v2927
  %3227 = vmatmul.bf16.gmra.mxu0 %v2051
  %v3228 = vpop.f32.mrf.mxu0
  %v3229 = vadd.f32 %v3215, %v3228
  %v3230 = vpop.f32.mrf.mxu0
  %v3231 = vadd.f32 %v3217, %v3230
  %3232 = vdwg.mxu0
  %3233 = vmatpush.bf16.msra.mxu0 %v2942
  %3234 = vmatpush.bf16.msra.mxu0 %v2941
  %3235 = vmatpush.bf16.msra.mxu0 %v2940
  %3236 = vmatpush.bf16.msra.mxu0 %v2939
  %3237 = vmatpush.bf16.msra.mxu0 %v2938
  %3238 = vmatpush.bf16.msra.mxu0 %v2937
  %3239 = vmatpush.bf16.msra.mxu0 %v2936
  %3240 = vmatpush.bf16.msra.mxu0 %v2935
  %3241 = vmatmul.bf16.gmra.mxu0 %v2057
  %v3242 = vpop.f32.mrf.mxu0
  %v3243 = vadd.f32 %v3229, %v3242
  %v3244 = vpop.f32.mrf.mxu0
  %v3245 = vadd.f32 %v3231, %v3244
  %3246 = vdwg.mxu0
  %3247 = vmatpush.bf16.msra.mxu0 %v2950
  %3248 = vmatpush.bf16.msra.mxu0 %v2949
  %3249 = vmatpush.bf16.msra.mxu0 %v2948
  %3250 = vmatpush.bf16.msra.mxu0 %v2947
  %3251 = vmatpush.bf16.msra.mxu0 %v2946
  %3252 = vmatpush.bf16.msra.mxu0 %v2945
  %3253 = vmatpush.bf16.msra.mxu0 %v2944
  %3254 = vmatpush.bf16.msra.mxu0 %v2943
  %3255 = vmatmul.bf16.gmra.mxu0 %v2063
  %v3256 = vpop.f32.mrf.mxu0
  %v3257 = vadd.f32 %v3243, %v3256
  %v3258 = vpop.f32.mrf.mxu0
  %v3259 = vadd.f32 %v3245, %v3258
  %3260 = vdwg.mxu0
  %3261 = vmatpush.bf16.msra.mxu0 %v2958
  %3262 = vmatpush.bf16.msra.mxu0 %v2957
  %3263 = vmatpush.bf16.msra.mxu0 %v2956
  %3264 = vmatpush.bf16.msra.mxu0 %v2955
  %3265 = vmatpush.bf16.msra.mxu0 %v2954
  %3266 = vmatpush.bf16.msra.mxu0 %v2953
  %3267 = vmatpush.bf16.msra.mxu0 %v2952
  %3268 = vmatpush.bf16.msra.mxu0 %v2951
  %3269 = vmatmul.bf16.gmra.mxu0 %v2069
  %v3270 = vpop.f32.mrf.mxu0
  %v3271 = vadd.f32 %v3257, %v3270
  %v3272 = vpop.f32.mrf.mxu0
  %v3273 = vadd.f32 %v3259, %v3272
  %3274 = vdwg.mxu0
  %3275 = vmatpush.bf16.msra.mxu0 %v2966
  %3276 = vmatpush.bf16.msra.mxu0 %v2965
  %3277 = vmatpush.bf16.msra.mxu0 %v2964
  %3278 = vmatpush.bf16.msra.mxu0 %v2963
  %3279 = vmatpush.bf16.msra.mxu0 %v2962
  %3280 = vmatpush.bf16.msra.mxu0 %v2961
  %3281 = vmatpush.bf16.msra.mxu0 %v2960
  %3282 = vmatpush.bf16.msra.mxu0 %v2959
  %3283 = vmatmul.bf16.gmra.mxu0 %v2075
  %v3284 = vpop.f32.mrf.mxu0
  %v3285 = vadd.f32 %v3271, %v3284
  %v3286 = vpop.f32.mrf.mxu0
  %v3287 = vadd.f32 %v3273, %v3286
  %3288 = vdwg.mxu0
  %3289 = vmatpush.bf16.msra.mxu0 %v2974
  %3290 = vmatpush.bf16.msra.mxu0 %v2973
  %3291 = vmatpush.bf16.msra.mxu0 %v2972
  %3292 = vmatpush.bf16.msra.mxu0 %v2971
  %3293 = vmatpush.bf16.msra.mxu0 %v2970
  %3294 = vmatpush.bf16.msra.mxu0 %v2969
  %3295 = vmatpush.bf16.msra.mxu0 %v2968
  %3296 = vmatpush.bf16.msra.mxu0 %v2967
  %3297 = vmatmul.bf16.gmra.mxu0 %v2081
  %v3298 = vpop.f32.mrf.mxu0
  %v3299 = vadd.f32 %v3285, %v3298
  %v3300 = vpop.f32.mrf.mxu0
  %v3301 = vadd.f32 %v3287, %v3300
  %3302 = vdwg.mxu0
  %3303 = vmatpush.bf16.msra.mxu0 %v2982
  %3304 = vmatpush.bf16.msra.mxu0 %v2981
  %3305 = vmatpush.bf16.msra.mxu0 %v2980
  %3306 = vmatpush.bf16.msra.mxu0 %v2979
  %3307 = vmatpush.bf16.msra.mxu0 %v2978
  %3308 = vmatpush.bf16.msra.mxu0 %v2977
  %3309 = vmatpush.bf16.msra.mxu0 %v2976
  %3310 = vmatpush.bf16.msra.mxu0 %v2975
  %3311 = vmatmul.bf16.gmra.mxu0 %v2087
  %v3312 = vpop.f32.mrf.mxu0
  %v3313 = vadd.f32 %v3299, %v3312
  %v3314 = vpop.f32.mrf.mxu0
  %v3315 = vadd.f32 %v3301, %v3314
  %3316 = vdwg.mxu0
  %3317 = vmatpush.bf16.msra.mxu0 %v2990
  %3318 = vmatpush.bf16.msra.mxu0 %v2989
  %3319 = vmatpush.bf16.msra.mxu0 %v2988
  %3320 = vmatpush.bf16.msra.mxu0 %v2987
  %3321 = vmatpush.bf16.msra.mxu0 %v2986
  %3322 = vmatpush.bf16.msra.mxu0 %v2985
  %3323 = vmatpush.bf16.msra.mxu0 %v2984
  %3324 = vmatpush.bf16.msra.mxu0 %v2983
  %3325 = vmatmul.bf16.gmra.mxu0 %v2093
  %v3326 = vpop.f32.mrf.mxu0
  %v3327 = vadd.f32 %v3313, %v3326
  %v3328 = vpop.f32.mrf.mxu0
  %v3329 = vadd.f32 %v3315, %v3328
  %3330 = vdwg.mxu0
  %3331 = vmatpush.bf16.msra.mxu0 %v2998
  %3332 = vmatpush.bf16.msra.mxu0 %v2997
  %3333 = vmatpush.bf16.msra.mxu0 %v2996
  %3334 = vmatpush.bf16.msra.mxu0 %v2995
  %3335 = vmatpush.bf16.msra.mxu0 %v2994
  %3336 = vmatpush.bf16.msra.mxu0 %v2993
  %3337 = vmatpush.bf16.msra.mxu0 %v2992
  %3338 = vmatpush.bf16.msra.mxu0 %v2991
  %3339 = vmatmul.bf16.gmra.mxu0 %v2099
  %v3340 = vpop.f32.mrf.mxu0
  %v3341 = vadd.f32 %v3327, %v3340
  %v3342 = vpop.f32.mrf.mxu0
  %v3343 = vadd.f32 %v3329, %v3342
  %3344 = vdwg.mxu0
  %3345 = vmatpush.bf16.msra.mxu0 %v3006
  %3346 = vmatpush.bf16.msra.mxu0 %v3005
  %3347 = vmatpush.bf16.msra.mxu0 %v3004
  %3348 = vmatpush.bf16.msra.mxu0 %v3003
  %3349 = vmatpush.bf16.msra.mxu0 %v3002
  %3350 = vmatpush.bf16.msra.mxu0 %v3001
  %3351 = vmatpush.bf16.msra.mxu0 %v3000
  %3352 = vmatpush.bf16.msra.mxu0 %v2999
  %3353 = vmatmul.bf16.gmra.mxu0 %v2105
  %v3354 = vpop.f32.mrf.mxu0
  %v3355 = vadd.f32 %v3341, %v3354
  %v3356 = vpop.f32.mrf.mxu0
  %v3357 = vadd.f32 %v3343, %v3356
  %3358 = vdwg.mxu0
  %v3359 = vmax.f32 %v3355, 0.0
  %v3360 = vmax.f32 %v3357, 0.0
  %v3361 = vpack.c.bf16 %v3360, %v3359
  %v3362 = vld [vmem:[%s8] sm:$0xf]
  %v3363 = vld [vmem:[%s8 + $0x4] sm:$0xf]
  %v3364 = vld [vmem:[%s8 + $0x8] sm:$0xf]
  %v3365 = vld [vmem:[%s8 + $0xc] sm:$0xf]
  %v3366 = vld [vmem:[%s8 + $0x10] sm:$0xf]
  %v3367 = vld [vmem:[%s8 + $0x14] sm:$0xf]
  %v3368 = vld [vmem:[%s8 + $0x18] sm:$0xf]
  %v3369 = vld [vmem:[%s8 + $0x1c] sm:$0xf]
  %v3370 = vld [vmem:[%s9] sm:$0x1]
  %v3372 = vperm.slane %v3370, 0
  %v3382 = vunpack.c.l.b16 %v3362
  %v3383 = vunpack.c.l.b16 %v3363
  %v3384 = vunpack.c.l.b16 %v3364
  %v3385 = vunpack.c.l.b16 %v3365
  %v3386 = vunpack.c.l.b16 %v3366
  %v3387 = vunpack.c.l.b16 %v3367
  %v3388 = vunpack.c.l.b16 %v3368
  %v3389 = vunpack.c.l.b16 %v3369
  %v3390 = vpack.c.b16 %v3383, %v3382
  %v3391 = vpack.c.b16 %v3385, %v3384
  %v3392 = vpack.c.b16 %v3387, %v3386
  %v3393 = vpack.c.b16 %v3389, %v3388
  %vm3398 = vcmask 523264
  %v3400 = vsel %vm3398, %v3361, 0
  %3402 = vmatpush.bf16.msra.mxu0 0
  %3403 = vmatpush.bf16.msra.mxu0 0
  %3404 = vmatpush.bf16.msra.mxu0 0
  %3405 = vmatpush.bf16.msra.mxu0 0
  %3406 = vmatpush.bf16.msra.mxu0 %v3393
  %3407 = vmatpush.bf16.msra.mxu0 %v3392
  %3408 = vmatpush.bf16.msra.mxu0 %v3391
  %3409 = vmatpush.bf16.msra.mxu0 %v3390
  %3410 = vmatmul.bf16.gmra.mxu0 %v3400
  %v3411 = vpop.f32.mrf.mxu0
  %v3412 = vadd.f32 %v3372, %v3411
  %v3413 = vpop.f32.mrf.mxu0
  %v3414 = vadd.f32 %v3372, %v3413
  %3415 = vdwg.mxu0
  %3416 = vst [vmem:[%s10] sm:$0xff] %v3412
  %3417 = vst [vmem:[%s10 + $0x8] sm:$0xff] %v3414
  // Predicated region
  $region42: #{convolutional_model_forward.1} parent=0 // pred_check
    _
  $region43: #{convolutional_model_forward.1} parent=0 // pred_check_branch
    %3419 = sbr.rel (0) target = $region45
  $region44: #{convolutional_model_forward.1} parent=0 // pred_region
    _
  $region45: #{convolutional_model_forward.1} parent=0 // pred_fallthru
    _
  // Predicated region
  $region46: #{convolutional_model_forward.1} parent=0 // pred_check
    _
  $region47: #{convolutional_model_forward.1} parent=0 // pred_check_branch
    %3421 = sbr.rel (0) target = $region49
  $region48: #{convolutional_model_forward.1} parent=0 // pred_region
    _
  $region49: #{convolutional_model_forward.1} parent=0 // pred_fallthru
    _

</llo_original>
